<compile_context>
chip_gen: v5e
topology: v5e:2x2
jax: 0.10.0
libtpu: 0.0.40
codegen_flags: <defaults>
</compile_context>

<pallas_src>
import math

import jax
import jax.numpy as jnp
from jax.experimental import pallas as pl
from jax.experimental.pallas import tpu as pltpu


def _pma_kernel(q_att_ref, q_res_ref, mask_ref, x_ref, w_kv_ref, b_kv_ref,
                w_o_ref, b_o_ref, o_ref):
    """One grid step: Bt batch elements, full attention + output MLP.

    q_att_ref : (H*Sd, D)  head-masked, 1/sqrt(D)-scaled Q   (matmul dtype)
    q_res_ref : (Sd, D)    dense Q projection for the residual (f32)
    mask_ref  : (H, 1, D)  per-head lane mask (f32)
    x_ref     : (Bt*N, D)  flattened batch slab of set elements
    w_kv_ref  : (D, 2D)    [Wk^T | Wv^T]            b_kv_ref : (1, 2D)
    w_o_ref   : (D, D)     Wo^T                     b_o_ref  : (1, D)
    o_ref     : (Bt*Sd, D) output slab
    """
    HSd, D = q_att_ref.shape
    Sd = q_res_ref.shape[0]
    H = mask_ref.shape[0]
    Bt = o_ref.shape[0] // Sd
    N = x_ref.shape[0] // Bt
    mm_dtype = x_ref.dtype

    # ---- fused K/V projection: one matmul on the whole (Bt*N, D) slab ------
    kv = jnp.dot(x_ref[...], w_kv_ref[...],
                 preferred_element_type=jnp.float32) + b_kv_ref[...]
    kv = kv.astype(mm_dtype)
    k = kv[:, :D].reshape(Bt, N, D)
    v = kv[:, D:].reshape(Bt, N, D)

    # ---- scores: contract over the FULL D with the head-masked Q -----------
    # Row h*Sd+s of q_att carries Q[s]/sqrt(D) only inside head h's ds-wide
    # column chunk (zeros elsewhere), so a single dense batched matmul yields
    # all H*Sd per-head score rows at once — no per-head lane slicing.
    qb = jnp.broadcast_to(q_att_ref[...], (Bt, HSd, D))
    s = jnp.einsum('bqd,bkd->bqk', qb, k,
                   preferred_element_type=jnp.float32)          # (Bt, H*Sd, N)

    # ---- softmax over N (f32 throughout, exact division) --------------------
    s = s - jnp.max(s, axis=-1, keepdims=True)
    e = jnp.exp(s)
    a = e / jnp.sum(e, axis=-1, keepdims=True)

    # ---- attend against full V, then select each lane's own head ------------
    # attn_full[b, h*Sd+s, :] = A_{b,h}[s] @ V_b over ALL D columns; the true
    # head output keeps only head h's ds-wide chunk, selected via a
    # tile-aligned reshape + mask multiply + sum over the (major) head axis.
    # (Probabilities are cast to the matmul dtype for the MXU; with bf16
    # operands this is the usual flash-attention-style precision trade.)
    attn_full = jnp.einsum('bqn,bnd->bqd', a.astype(mm_dtype), v,
                           preferred_element_type=jnp.float32)  # (Bt, H*Sd, D)
    attn = jnp.sum(attn_full.reshape(Bt, H, Sd, D) * mask_ref[...][None],
                   axis=1)                                      # (Bt, Sd, D)

    # ---- residual + output MLP: O = O + relu(fc_o(O)) -----------------------
    o = (q_res_ref[...][None] + attn).reshape(Bt * Sd, D)       # f32
    proj = jnp.dot(o.astype(mm_dtype), w_o_ref[...],
                   preferred_element_type=jnp.float32) + b_o_ref[...]
    o_ref[...] = (o + jnp.maximum(proj, 0.0)).astype(o_ref.dtype)


def _num_tensorcores() -> int:
    """Best-effort TensorCores per device (v7x: 2, v5e/v6e: 1)."""
    try:
        dev = jax.devices()[0]
        for attr in ("num_cores", "core_count"):
            n = getattr(dev, attr, None)
            if isinstance(n, int) and n > 0:
                return n
        kind = (getattr(dev, "device_kind", "") or "").lower()
        if "v7" in kind:
            return 2
    except Exception:
        pass
    return 1


def _derive_grid_steps(batch: int, requested) -> int:
    steps = requested if requested is not None else min(batch, _num_tensorcores())
    steps = max(1, min(batch, int(steps)))
    while batch % steps:      # never jnp.pad: only split when it divides evenly
        steps -= 1
    return steps


def pma_forward(S_param, X, params, *, num_heads: int,
                grid_steps=None, matmul_dtype=None):
    """PMA forward. S_param: (1, Sd, D), X: (B, N, D) -> (B, Sd, D).

    matmul_dtype: pass jnp.bfloat16 on v6e/v7x to feed the MXU bf16 operands
    (accumulation / softmax / residual math stays f32). None keeps X's dtype.
    """
    B, N, D = X.shape
    _, Sd, _ = S_param.shape
    assert D % num_heads == 0
    ds = D // num_heads
    out_dtype = X.dtype
    mm_dtype = out_dtype if matmul_dtype is None else matmul_dtype

    # Batch-invariant Q projection: computed exactly once outside the kernel.
    q_dense = jnp.dot(S_param[0], params["wq"].T) + params["bq"]         # (Sd, D)

    # Head-masked, pre-scaled Q for the score matmul: row h*Sd+s carries
    # Q[s]/sqrt(D) in head h's ds-wide column chunk, zeros elsewhere, so the
    # kernel contracts over the full D (MXU pads the contraction anyway) with
    # no per-head lane slices.
    head_mask = (jnp.arange(D)[None, :] // ds
                 == jnp.arange(num_heads)[:, None]).astype(jnp.float32)  # (H, D)
    scale = 1.0 / math.sqrt(D)               # sqrt(dim_V), per the reference
    q_att = (q_dense[None, :, :] * head_mask[:, None, :] * scale
             ).reshape(num_heads * Sd, D)

    # Fused K/V weight (D, 2D) + stacked bias; fc_o weight pre-transposed —
    # the kernel never runs an on-chip transpose.
    w_kv = jnp.concatenate([params["wk"].T, params["wv"].T], axis=1)     # (D, 2D)
    b_kv = jnp.concatenate([params["bk"], params["bv"]]).reshape(1, 2 * D)
    w_o = params["wo"].T                                                  # (D, D)
    b_o = params["bo"].reshape(1, D)

    steps = _derive_grid_steps(B, grid_steps)
    Bt = B // steps

    out2d = pl.pallas_call(
        _pma_kernel,
        out_shape=jax.ShapeDtypeStruct((B * Sd, D), out_dtype),
        grid_spec=pltpu.PrefetchScalarGridSpec(
            num_scalar_prefetch=0,
            grid=(steps,),
            in_specs=[
                pl.BlockSpec((num_heads * Sd, D), lambda b: (0, 0)),   # masked Q
                pl.BlockSpec((Sd, D), lambda b: (0, 0)),               # dense Q
                pl.BlockSpec((num_heads, 1, D), lambda b: (0, 0, 0)),  # head mask
                pl.BlockSpec((Bt * N, D), lambda b: (b, 0)),           # X slab
                pl.BlockSpec((D, 2 * D), lambda b: (0, 0)),            # fused KV W
                pl.BlockSpec((1, 2 * D), lambda b: (0, 0)),            # fused KV b
                pl.BlockSpec((D, D), lambda b: (0, 0)),                # fc_o W
                pl.BlockSpec((1, D), lambda b: (0, 0)),                # fc_o b
            ],
            out_specs=pl.BlockSpec((Bt * Sd, D), lambda b: (b, 0)),
        ),
        compiler_params=pltpu.CompilerParams(
            dimension_semantics=("parallel",),
            vmem_limit_bytes=32 * 1024 * 1024,
        ),
    )(
        q_att.astype(mm_dtype),
        q_dense.astype(jnp.float32),
        head_mask.reshape(num_heads, 1, D).astype(jnp.float32),
        X.reshape(B * N, D).astype(mm_dtype),
        w_kv.astype(mm_dtype),
        b_kv.astype(jnp.float32),
        w_o.astype(mm_dtype),
        b_o.astype(jnp.float32),
    )
    return out2d.reshape(B, Sd, D)


def _reference(S_param, X, params, *, num_heads: int):
    """Pure-JAX reference matching the PyTorch MAB semantics (ln=False)."""
    B, N, D = X.shape
    Sd = S_param.shape[1]
    q = jnp.einsum("bsd,ed->bse", jnp.broadcast_to(S_param, (B, Sd, D)),
                   params["wq"]) + params["bq"]
    k = jnp.einsum("bnd,ed->bne", X, params["wk"]) + params["bk"]
    v = jnp.einsum("bnd,ed->bne", X, params["wv"]) + params["bv"]
    ds = D // num_heads
    outs = []
    for h in range(num_heads):
        qh = q[..., h * ds:(h + 1) * ds]
        kh = k[..., h * ds:(h + 1) * ds]
        vh = v[..., h * ds:(h + 1) * ds]
        a = jax.nn.softmax(jnp.einsum("bsd,bnd->bsn", qh, kh) / math.sqrt(D), axis=-1)
        outs.append(qh + jnp.einsum("bsn,bnd->bsd", a, vh))
    o = jnp.concatenate(outs, axis=-1)
    o = o + jax.nn.relu(jnp.einsum("bsd,ed->bse", o, params["wo"]) + params["bo"])
    return o


if __name__ == "__main__":
    B, N, D = 8, 16, 32        # batch, set size, dim
    num_heads = 4
    num_seeds = 8

    key = jax.random.PRNGKey(0)
    ks = jax.random.split(key, 11)

    # Deterministic synthetic parameter init (xavier-uniform-ish S, scaled normal Linears).
    bound_s = math.sqrt(6.0 / (num_seeds + D))
    S_param = jax.random.uniform(ks[0], (1, num_seeds, D), jnp.float32, -bound_s, bound_s)

    def lin_init(kw, kb, d_in, d_out):
        w = jax.random.normal(kw, (d_out, d_in), jnp.float32) * (1.0 / math.sqrt(d_in))
        b = jax.random.normal(kb, (d_out,), jnp.float32) * 0.01
        return w, b

    wq, bq = lin_init(ks[1], ks[2], D, D)
    wk, bk = lin_init(ks[3], ks[4], D, D)
    wv, bv = lin_init(ks[5], ks[6], D, D)
    wo, bo = lin_init(ks[7], ks[8], D, D)
    params = dict(wq=wq, bq=bq, wk=wk, bk=bk, wv=wv, bv=bv, wo=wo, bo=bo)

    X = jax.random.normal(ks[9], (B, N, D), jnp.float32)
    ref = _reference(S_param, X, params, num_heads=num_heads)

    # f32 path (grid extent auto-derived from the detected TensorCore count).
    out = pma_forward(S_param, X, params, num_heads=num_heads)
    out = jax.block_until_ready(out)
    assert out.shape == (B, num_seeds, D)
    assert jnp.allclose(out, ref, atol=2e-3, rtol=2e-3), "f32 mismatch vs reference"

    # bf16 MXU-operand path (v6e/v7x feedback), forced onto a 2-step grid to
    # also exercise the batch-tiled "parallel" BlockSpecs.
    out_bf16 = pma_forward(S_param, X, params, num_heads=num_heads,
                           grid_steps=2, matmul_dtype=jnp.bfloat16)
    out_bf16 = jax.block_until_ready(out_bf16)
    assert jnp.allclose(out_bf16, ref, atol=1e-1, rtol=1e-1), "bf16 mismatch vs reference"

    print("KERNEL_OK")
</pallas_src>

<mosaic_0001>
module attributes {stable_mosaic.version = 11 : i64} {
  func.func @_pma_kernel(%arg0: i32, %arg1: memref<32x32xf32, #tpu.memory_space<vmem>>, %arg2: memref<8x32xf32, #tpu.memory_space<vmem>>, %arg3: memref<4x1x32xf32, #tpu.memory_space<vmem>>, %arg4: memref<128x32xf32, #tpu.memory_space<vmem>>, %arg5: memref<32x64xf32, #tpu.memory_space<vmem>>, %arg6: memref<1x64xf32, #tpu.memory_space<vmem>>, %arg7: memref<32x32xf32, #tpu.memory_space<vmem>>, %arg8: memref<1x32xf32, #tpu.memory_space<vmem>>, %arg9: memref<64x32xf32, #tpu.memory_space<vmem>>) attributes {dimension_semantics = [#tpu.dimension_semantics<parallel>], iteration_bounds = array<i64: 1>, scalar_prefetch = 0 : i64, scratch_operands = 0 : i64, tpu.core_type = #tpu.core_type<tc>, window_params = [{pipeline_mode = #tpu.pipeline_mode<synchronous>, transform_indices = @transform_0, window_bounds = array<i64: 32, 32>}, {pipeline_mode = #tpu.pipeline_mode<synchronous>, transform_indices = @transform_1, window_bounds = array<i64: 8, 32>}, {pipeline_mode = #tpu.pipeline_mode<synchronous>, transform_indices = @transform_2, window_bounds = array<i64: 4, 1, 32>}, {transform_indices = @transform_3, window_bounds = array<i64: 128, 32>}, {pipeline_mode = #tpu.pipeline_mode<synchronous>, transform_indices = @transform_4, window_bounds = array<i64: 32, 64>}, {pipeline_mode = #tpu.pipeline_mode<synchronous>, transform_indices = @transform_5, window_bounds = array<i64: 1, 64>}, {pipeline_mode = #tpu.pipeline_mode<synchronous>, transform_indices = @transform_6, window_bounds = array<i64: 32, 32>}, {pipeline_mode = #tpu.pipeline_mode<synchronous>, transform_indices = @transform_7, window_bounds = array<i64: 1, 32>}, {transform_indices = @transform_8, window_bounds = array<i64: 64, 32>}]} {
    %c0 = arith.constant 0 : index
    %c0_0 = arith.constant 0 : index
    %0 = vector.load %arg4[%c0, %c0_0] : memref<128x32xf32, #tpu.memory_space<vmem>>, vector<128x32xf32>
    %c0_1 = arith.constant 0 : index
    %c0_2 = arith.constant 0 : index
    %1 = vector.load %arg5[%c0_1, %c0_2] : memref<32x64xf32, #tpu.memory_space<vmem>>, vector<32x64xf32>
    %cst = arith.constant dense<0.000000e+00> : vector<128x64xf32>
    %2 = tpu.matmul %0, %1, %cst {dimension_numbers = #tpu.dot_dimension_numbers<[1], [0], [0], [1], [0, 0, 1, 1], [], []>} : vector<128x32xf32>, vector<32x64xf32>, vector<128x64xf32> -> vector<128x64xf32>
    %c0_3 = arith.constant 0 : index
    %c0_4 = arith.constant 0 : index
    %3 = vector.load %arg6[%c0_3, %c0_4] : memref<1x64xf32, #tpu.memory_space<vmem>>, vector<1x64xf32>
    %4 = vector.broadcast %3 : vector<1x64xf32> to vector<128x64xf32>
    %5 = arith.addf %2, %4 : vector<128x64xf32>
    %6 = vector.extract_strided_slice %5 {offsets = [0, 0], sizes = [128, 32], strides = [1, 1]} : vector<128x64xf32> to vector<128x32xf32>
    %7 = vector.shape_cast %6 : vector<128x32xf32> to vector<8x16x32xf32>
    %8 = vector.extract_strided_slice %5 {offsets = [0, 32], sizes = [128, 32], strides = [1, 1]} : vector<128x64xf32> to vector<128x32xf32>
    %9 = vector.shape_cast %8 : vector<128x32xf32> to vector<8x16x32xf32>
    %c0_5 = arith.constant 0 : index
    %c0_6 = arith.constant 0 : index
    %10 = vector.load %arg1[%c0_5, %c0_6] : memref<32x32xf32, #tpu.memory_space<vmem>>, vector<32x32xf32>
    %11 = vector.shape_cast %10 : vector<32x32xf32> to vector<1x32x32xf32>
    %12 = vector.broadcast %11 : vector<1x32x32xf32> to vector<8x32x32xf32>
    "tpu.trace_start"() <{level = 10 : i32, message = "bqd,bkd->bqk"}> : () -> ()
    %cst_7 = arith.constant dense<0.000000e+00> : vector<8x32x16xf32>
    %13 = tpu.matmul %12, %7, %cst_7 {dimension_numbers = #tpu.dot_dimension_numbers<[2], [2], [1], [1], [0, 0, 0, 1, 1, 1], [0], [0]>} : vector<8x32x32xf32>, vector<8x16x32xf32>, vector<8x32x16xf32> -> vector<8x32x16xf32>
    "tpu.trace_stop"() : () -> ()
    %cst_8 = arith.constant dense<0xFF800000> : vector<8x32xf32>
    %14 = vector.multi_reduction <maximumf>, %13, %cst_8 [2] : vector<8x32x16xf32> to vector<8x32xf32>
    %15 = vector.shape_cast %14 : vector<8x32xf32> to vector<8x32x1xf32>
    %16 = vector.broadcast %15 : vector<8x32x1xf32> to vector<8x32x16xf32>
    %17 = arith.subf %13, %16 : vector<8x32x16xf32>
    %18 = math.exp %17 : vector<8x32x16xf32>
    %cst_9 = arith.constant dense<0.000000e+00> : vector<8x32xf32>
    %19 = vector.multi_reduction <add>, %18, %cst_9 [2] : vector<8x32x16xf32> to vector<8x32xf32>
    %20 = vector.shape_cast %19 : vector<8x32xf32> to vector<8x32x1xf32>
    %21 = vector.broadcast %20 : vector<8x32x1xf32> to vector<8x32x16xf32>
    %22 = arith.divf %18, %21 : vector<8x32x16xf32>
    "tpu.trace_start"() <{level = 10 : i32, message = "bqn,bnd->bqd"}> : () -> ()
    %cst_10 = arith.constant dense<0.000000e+00> : vector<8x32x32xf32>
    %23 = tpu.matmul %22, %9, %cst_10 {dimension_numbers = #tpu.dot_dimension_numbers<[2], [1], [1], [2], [0, 0, 0, 1, 1, 2], [0], [0]>} : vector<8x32x16xf32>, vector<8x16x32xf32>, vector<8x32x32xf32> -> vector<8x32x32xf32>
    "tpu.trace_stop"() : () -> ()
    %24 = vector.shape_cast %23 : vector<8x32x32xf32> to vector<8x4x8x32xf32>
    %c0_11 = arith.constant 0 : index
    %c0_12 = arith.constant 0 : index
    %c0_13 = arith.constant 0 : index
    %25 = vector.load %arg3[%c0_11, %c0_12, %c0_13] : memref<4x1x32xf32, #tpu.memory_space<vmem>>, vector<4x1x32xf32>
    %26 = vector.shape_cast %25 : vector<4x1x32xf32> to vector<1x4x1x32xf32>
    %27 = vector.broadcast %26 : vector<1x4x1x32xf32> to vector<8x4x8x32xf32>
    %28 = arith.mulf %24, %27 : vector<8x4x8x32xf32>
    %cst_14 = arith.constant dense<0.000000e+00> : vector<8x8x32xf32>
    %29 = vector.multi_reduction <add>, %28, %cst_14 [1] : vector<8x4x8x32xf32> to vector<8x8x32xf32>
    %c0_15 = arith.constant 0 : index
    %c0_16 = arith.constant 0 : index
    %30 = vector.load %arg2[%c0_15, %c0_16] : memref<8x32xf32, #tpu.memory_space<vmem>>, vector<8x32xf32>
    %31 = vector.shape_cast %30 : vector<8x32xf32> to vector<1x8x32xf32>
    %32 = vector.broadcast %31 : vector<1x8x32xf32> to vector<8x8x32xf32>
    %33 = arith.addf %32, %29 : vector<8x8x32xf32>
    %34 = vector.shape_cast %33 : vector<8x8x32xf32> to vector<64x32xf32>
    %c0_17 = arith.constant 0 : index
    %c0_18 = arith.constant 0 : index
    %35 = vector.load %arg7[%c0_17, %c0_18] : memref<32x32xf32, #tpu.memory_space<vmem>>, vector<32x32xf32>
    %cst_19 = arith.constant dense<0.000000e+00> : vector<64x32xf32>
    %36 = tpu.matmul %34, %35, %cst_19 {dimension_numbers = #tpu.dot_dimension_numbers<[1], [0], [0], [1], [0, 0, 1, 1], [], []>} : vector<64x32xf32>, vector<32x32xf32>, vector<64x32xf32> -> vector<64x32xf32>
    %c0_20 = arith.constant 0 : index
    %c0_21 = arith.constant 0 : index
    %37 = vector.load %arg8[%c0_20, %c0_21] : memref<1x32xf32, #tpu.memory_space<vmem>>, vector<1x32xf32>
    %38 = vector.broadcast %37 : vector<1x32xf32> to vector<64x32xf32>
    %39 = arith.addf %36, %38 : vector<64x32xf32>
    %cst_22 = arith.constant 0.000000e+00 : f32
    %40 = vector.broadcast %cst_22 : f32 to vector<64x32xf32>
    %41 = arith.maximumf %39, %40 : vector<64x32xf32>
    %42 = arith.addf %34, %41 : vector<64x32xf32>
    %c0_23 = arith.constant 0 : index
    %c0_24 = arith.constant 0 : index
    %43 = vector.load %arg9[%c0_23, %c0_24] : memref<64x32xf32, #tpu.memory_space<vmem>>, vector<64x32xf32>
    tpu.vector_store %arg9[%c0_23, %c0_24], %42 {strides = array<i32>} : memref<64x32xf32, #tpu.memory_space<vmem>>, vector<64x32xf32>,
    return
  }
  func.func @transform_0(%arg0: i32) -> (i32, i32) {
    %c0_i32 = arith.constant 0 : i32
    %c0_i32_0 = arith.constant 0 : i32
    %c0_i32_1 = arith.constant 0 : i32
    return %c0_i32, %c0_i32_0 : i32, i32
  }
  func.func @transform_1(%arg0: i32) -> (i32, i32) {
    %c0_i32 = arith.constant 0 : i32
    %c0_i32_0 = arith.constant 0 : i32
    %c0_i32_1 = arith.constant 0 : i32
    return %c0_i32, %c0_i32_0 : i32, i32
  }
  func.func @transform_2(%arg0: i32) -> (i32, i32, i32) {
    %c0_i32 = arith.constant 0 : i32
    %c0_i32_0 = arith.constant 0 : i32
    %c0_i32_1 = arith.constant 0 : i32
    %c0_i32_2 = arith.constant 0 : i32
    return %c0_i32, %c0_i32_0, %c0_i32_1 : i32, i32, i32
  }
  func.func @transform_3(%arg0: i32) -> (i32, i32) {
    %c0_i32 = arith.constant 0 : i32
    %c0_i32_0 = arith.constant 0 : i32
    return %arg0, %c0_i32 : i32, i32
  }
  func.func @transform_4(%arg0: i32) -> (i32, i32) {
    %c0_i32 = arith.constant 0 : i32
    %c0_i32_0 = arith.constant 0 : i32
    %c0_i32_1 = arith.constant 0 : i32
    return %c0_i32, %c0_i32_0 : i32, i32
  }
  func.func @transform_5(%arg0: i32) -> (i32, i32) {
    %c0_i32 = arith.constant 0 : i32
    %c0_i32_0 = arith.constant 0 : i32
    %c0_i32_1 = arith.constant 0 : i32
    return %c0_i32, %c0_i32_0 : i32, i32
  }
  func.func @transform_6(%arg0: i32) -> (i32, i32) {
    %c0_i32 = arith.constant 0 : i32
    %c0_i32_0 = arith.constant 0 : i32
    %c0_i32_1 = arith.constant 0 : i32
    return %c0_i32, %c0_i32_0 : i32, i32
  }
  func.func @transform_7(%arg0: i32) -> (i32, i32) {
    %c0_i32 = arith.constant 0 : i32
    %c0_i32_0 = arith.constant 0 : i32
    %c0_i32_1 = arith.constant 0 : i32
    return %c0_i32, %c0_i32_0 : i32, i32
  }
  func.func @transform_8(%arg0: i32) -> (i32, i32) {
    %c0_i32 = arith.constant 0 : i32
    %c0_i32_0 = arith.constant 0 : i32
    return %arg0, %c0_i32 : i32, i32
  }
}

</mosaic_0001>

<llo_original>
// kernel: tpu_custom_call.1
$region0: #{tpu_custom_call.1}
  #allocation0 [shape = 'u32[]', space=smem, size = 0x4, offset = 0x4, fixed_abs, tag = 'smem constant byte address 0x4 - core index']
  #allocation1 [shape = 'u32[72,128]{1,0:T(1,128)}', space=vmem, size = 0x9000, scoped, tag = 'internal scratch']
  %s0 = inlined_call_operand.vmem [shape: f32[32,32], index: 0, kind: input, shape index: {}]
  %s1 = inlined_call_operand.vmem [shape: f32[8,32], index: 1, kind: input, shape index: {}]
  %s2 = inlined_call_operand.vmem [shape: f32[4,1,32], index: 2, kind: input, shape index: {}]
  %s3 = inlined_call_operand.vmem [shape: f32[128,32], index: 3, kind: input, shape index: {}]
  %s4 = inlined_call_operand.vmem [shape: f32[32,64], index: 4, kind: input, shape index: {}]
  %s5 = inlined_call_operand.vmem [shape: f32[1,64], index: 5, kind: input, shape index: {}]
  %s6 = inlined_call_operand.vmem [shape: f32[32,32], index: 6, kind: input, shape index: {}]
  %s7 = inlined_call_operand.vmem [shape: f32[1,32], index: 7, kind: input, shape index: {}]
  %s8 = inlined_call_operand.vmem [shape: f32[64,32], index: 8, kind: output, shape index: {}]
  %s9 = sld [smem:[#allocation0]]
  $region42: #{tpu_custom_call.1} parent=0
    _
  %s11 = ssub.s32 1, %s9
  %s12 = scalar_select 0, %s11, %s9
  // Predicated region
  $region2: #{tpu_custom_call.1} parent=0 // pred_check
    _
  $region3: #{tpu_custom_call.1} parent=0 // pred_check_branch
    %14 = sbr.rel (0) target = $region5
  $region4: #{tpu_custom_call.1} parent=0 // pred_region
    _
  $region5: #{tpu_custom_call.1} parent=0 // pred_fallthru
    _
  // Predicated region
  $region6: #{tpu_custom_call.1} parent=0 // pred_check
    _
  $region7: #{tpu_custom_call.1} parent=0 // pred_check_branch
    %16 = sbr.rel (0) target = $region9
  $region8: #{tpu_custom_call.1} parent=0 // pred_region
    _
  $region9: #{tpu_custom_call.1} parent=0 // pred_fallthru
    _
  // Predicated region
  $region10: #{tpu_custom_call.1} parent=0 // pred_check
    _
  $region11: #{tpu_custom_call.1} parent=0 // pred_check_branch
    %18 = sbr.rel (0) target = $region13
  $region12: #{tpu_custom_call.1} parent=0 // pred_region
    _
  $region13: #{tpu_custom_call.1} parent=0 // pred_fallthru
    _
  // Predicated region
  $region14: #{tpu_custom_call.1} parent=0 // pred_check
    _
  $region15: #{tpu_custom_call.1} parent=0 // pred_check_branch
    %20 = sbr.rel (0) target = $region17
  $region16: #{tpu_custom_call.1} parent=0 // pred_region
    _
  $region17: #{tpu_custom_call.1} parent=0 // pred_fallthru
    _
  // Predicated region
  $region18: #{tpu_custom_call.1} parent=0 // pred_check
    _
  $region19: #{tpu_custom_call.1} parent=0 // pred_check_branch
    %22 = sbr.rel (0) target = $region21
  $region20: #{tpu_custom_call.1} parent=0 // pred_region
    _
  $region21: #{tpu_custom_call.1} parent=0 // pred_fallthru
    _
  // Predicated region
  $region22: #{tpu_custom_call.1} parent=0 // pred_check
    _
  $region23: #{tpu_custom_call.1} parent=0 // pred_check_branch
    %24 = sbr.rel (0) target = $region25
  $region24: #{tpu_custom_call.1} parent=0 // pred_region
    _
  $region25: #{tpu_custom_call.1} parent=0 // pred_fallthru
    _
  // Predicated region
  $region26: #{tpu_custom_call.1} parent=0 // pred_check
    _
  $region27: #{tpu_custom_call.1} parent=0 // pred_check_branch
    %26 = sbr.rel (0) target = $region29
  $region28: #{tpu_custom_call.1} parent=0 // pred_region
    _
  $region29: #{tpu_custom_call.1} parent=0 // pred_fallthru
    _
  // Predicated region
  $region30: #{tpu_custom_call.1} parent=0 // pred_check
    _
  $region31: #{tpu_custom_call.1} parent=0 // pred_check_branch
    %28 = sbr.rel (0) target = $region33
  $region32: #{tpu_custom_call.1} parent=0 // pred_region
    _
  $region33: #{tpu_custom_call.1} parent=0 // pred_fallthru
    _
  %v29 = vld [vmem:[%s3] sm:$0xff]
  %v30 = vld [vmem:[%s3 + $0x8] sm:$0xff]
  %v31 = vld [vmem:[%s3 + $0x10] sm:$0xff]
  %v32 = vld [vmem:[%s3 + $0x18] sm:$0xff]
  %v33 = vld [vmem:[%s3 + $0x20] sm:$0xff]
  %v34 = vld [vmem:[%s3 + $0x28] sm:$0xff]
  %v35 = vld [vmem:[%s3 + $0x30] sm:$0xff]
  %v36 = vld [vmem:[%s3 + $0x38] sm:$0xff]
  %v37 = vld [vmem:[%s3 + $0x40] sm:$0xff]
  %v38 = vld [vmem:[%s3 + $0x48] sm:$0xff]
  %v39 = vld [vmem:[%s3 + $0x50] sm:$0xff]
  %v40 = vld [vmem:[%s3 + $0x58] sm:$0xff]
  %v41 = vld [vmem:[%s3 + $0x60] sm:$0xff]
  %v42 = vld [vmem:[%s3 + $0x68] sm:$0xff]
  %v43 = vld [vmem:[%s3 + $0x70] sm:$0xff]
  %v44 = vld [vmem:[%s3 + $0x78] sm:$0xff]
  %v45 = vld [vmem:[%s4] sm:$0xff]
  %v46 = vld [vmem:[%s4 + $0x8] sm:$0xff]
  %v47 = vld [vmem:[%s4 + $0x10] sm:$0xff]
  %v48 = vld [vmem:[%s4 + $0x18] sm:$0xff]
  %v49 = vld [vmem:[%s5] sm:$0x1]
  %v51 = vperm.slane %v49, 0
  %vm53 = vcmask 261120
  %v55 = vsel %vm53, %v29, 0
  %v58 = vsel %vm53, %v30, 0
  %v61 = vsel %vm53, %v31, 0
  %v64 = vsel %vm53, %v32, 0
  %v67 = vsel %vm53, %v33, 0
  %v70 = vsel %vm53, %v34, 0
  %v73 = vsel %vm53, %v35, 0
  %v76 = vsel %vm53, %v36, 0
  %v79 = vsel %vm53, %v37, 0
  %v82 = vsel %vm53, %v38, 0
  %v85 = vsel %vm53, %v39, 0
  %v88 = vsel %vm53, %v40, 0
  %v91 = vsel %vm53, %v41, 0
  %v94 = vsel %vm53, %v42, 0
  %v97 = vsel %vm53, %v43, 0
  %v100 = vsel %vm53, %v44, 0
  %102 = vmatpush.msra.mxu0 0.0
  %103 = vmatpush.msra.mxu0 0.0
  %104 = vmatpush.msra.mxu0 0.0
  %105 = vmatpush.msra.mxu0 0.0
  %106 = vmatpush.msra.mxu0 0.0
  %107 = vmatpush.msra.mxu0 0.0
  %108 = vmatpush.msra.mxu0 0.0
  %109 = vmatpush.msra.mxu0 0.0
  %110 = vmatpush.msra.mxu0 0.0
  %111 = vmatpush.msra.mxu0 0.0
  %112 = vmatpush.msra.mxu0 0.0
  %113 = vmatpush.msra.mxu0 0.0
  %114 = vmatpush.msra.mxu0 %v48
  %115 = vmatpush.msra.mxu0 %v47
  %116 = vmatpush.msra.mxu0 %v46
  %117 = vmatpush.msra.mxu0 %v45
  %118 = vmatmul.f32.gmra.mxu0 %v55
  %v119 = vpop.f32.mrf.mxu0
  %v120 = vadd.f32 %v51, %v119
  %121 = vmatmul.f32.gmra.mxu0 %v58
  %v122 = vpop.f32.mrf.mxu0
  %v123 = vadd.f32 %v51, %v122
  %124 = vmatmul.f32.gmra.mxu0 %v61
  %v125 = vpop.f32.mrf.mxu0
  %v126 = vadd.f32 %v51, %v125
  %127 = vmatmul.f32.gmra.mxu0 %v64
  %v128 = vpop.f32.mrf.mxu0
  %v129 = vadd.f32 %v51, %v128
  %130 = vmatmul.f32.gmra.mxu0 %v67
  %v131 = vpop.f32.mrf.mxu0
  %v132 = vadd.f32 %v51, %v131
  %133 = vmatmul.f32.gmra.mxu0 %v70
  %v134 = vpop.f32.mrf.mxu0
  %v135 = vadd.f32 %v51, %v134
  %136 = vmatmul.f32.gmra.mxu0 %v73
  %v137 = vpop.f32.mrf.mxu0
  %v138 = vadd.f32 %v51, %v137
  %139 = vmatmul.f32.gmra.mxu0 %v76
  %v140 = vpop.f32.mrf.mxu0
  %v141 = vadd.f32 %v51, %v140
  %142 = vmatmul.f32.gmra.mxu0 %v79
  %v143 = vpop.f32.mrf.mxu0
  %v144 = vadd.f32 %v51, %v143
  %145 = vmatmul.f32.gmra.mxu0 %v82
  %v146 = vpop.f32.mrf.mxu0
  %v147 = vadd.f32 %v51, %v146
  %148 = vmatmul.f32.gmra.mxu0 %v85
  %v149 = vpop.f32.mrf.mxu0
  %v150 = vadd.f32 %v51, %v149
  %151 = vmatmul.f32.gmra.mxu0 %v88
  %v152 = vpop.f32.mrf.mxu0
  %v153 = vadd.f32 %v51, %v152
  %154 = vmatmul.f32.gmra.mxu0 %v91
  %v155 = vpop.f32.mrf.mxu0
  %v156 = vadd.f32 %v51, %v155
  %157 = vmatmul.f32.gmra.mxu0 %v94
  %v158 = vpop.f32.mrf.mxu0
  %v159 = vadd.f32 %v51, %v158
  %160 = vmatmul.f32.gmra.mxu0 %v97
  %v161 = vpop.f32.mrf.mxu0
  %v162 = vadd.f32 %v51, %v161
  %163 = vmatmul.f32.gmra.mxu0 %v100
  %v164 = vpop.f32.mrf.mxu0
  %v165 = vadd.f32 %v51, %v164
  %166 = vdwg.mxu0
  %v167 = vld [vmem:[%s0] sm:$0xff]
  %v168 = vld [vmem:[%s0 + $0x8] sm:$0xff]
  %v169 = vld [vmem:[%s0 + $0x10] sm:$0xff]
  %v170 = vld [vmem:[%s0 + $0x18] sm:$0xff]
  %v172 = vsel %vm53, %v167, 0
  %v175 = vsel %vm53, %v168, 0
  %v178 = vsel %vm53, %v169, 0
  %v181 = vsel %vm53, %v170, 0
  %v184 = vsel %vm53, %v120, 0
  %v187 = vsel %vm53, %v123, 0
  %189 = vmatpush.xpose.msra.mxu0 0.0
  %190 = vmatpush.xpose.msra.mxu0 0.0
  %191 = vmatpush.xpose.msra.mxu0 0.0
  %192 = vmatpush.xpose.msra.mxu0 0.0
  %193 = vmatpush.xpose.msra.mxu0 0.0
  %194 = vmatpush.xpose.msra.mxu0 0.0
  %195 = vmatpush.xpose.msra.mxu0 0.0
  %196 = vmatpush.xpose.msra.mxu0 0.0
  %197 = vmatpush.xpose.msra.mxu0 0.0
  %198 = vmatpush.xpose.msra.mxu0 0.0
  %199 = vmatpush.xpose.msra.mxu0 0.0
  %200 = vmatpush.xpose.msra.mxu0 0.0
  %201 = vmatpush.xpose.msra.mxu0 0.0
  %202 = vmatpush.xpose.msra.mxu0 0.0
  %203 = vmatpush.xpose.msra.mxu0 %v187
  %204 = vmatpush.xpose.msra.mxu0 %v184
  %205 = vmatmul.f32.gmra.mxu0 %v172
  %v206 = vpop.f32.mrf.mxu0
  %v207 = vadd.f32 0.0, %v206
  %208 = vmatmul.f32.gmra.mxu0 %v175
  %v209 = vpop.f32.mrf.mxu0
  %v210 = vadd.f32 0.0, %v209
  %211 = vmatmul.f32.gmra.mxu0 %v178
  %v212 = vpop.f32.mrf.mxu0
  %v213 = vadd.f32 0.0, %v212
  %214 = vmatmul.f32.gmra.mxu0 %v181
  %v215 = vpop.f32.mrf.mxu0
  %v216 = vadd.f32 0.0, %v215
  %217 = vdwg.mxu0
  %v219 = vsel %vm53, %v126, 0
  %v222 = vsel %vm53, %v129, 0
  %224 = vmatpush.xpose.msra.mxu0 0.0
  %225 = vmatpush.xpose.msra.mxu0 0.0
  %226 = vmatpush.xpose.msra.mxu0 0.0
  %227 = vmatpush.xpose.msra.mxu0 0.0
  %228 = vmatpush.xpose.msra.mxu0 0.0
  %229 = vmatpush.xpose.msra.mxu0 0.0
  %230 = vmatpush.xpose.msra.mxu0 0.0
  %231 = vmatpush.xpose.msra.mxu0 0.0
  %232 = vmatpush.xpose.msra.mxu0 0.0
  %233 = vmatpush.xpose.msra.mxu0 0.0
  %234 = vmatpush.xpose.msra.mxu0 0.0
  %235 = vmatpush.xpose.msra.mxu0 0.0
  %236 = vmatpush.xpose.msra.mxu0 0.0
  %237 = vmatpush.xpose.msra.mxu0 0.0
  %238 = vmatpush.xpose.msra.mxu0 %v222
  %239 = vmatpush.xpose.msra.mxu0 %v219
  %240 = vmatmul.f32.gmra.mxu0 %v172
  %v241 = vpop.f32.mrf.mxu0
  %v242 = vadd.f32 0.0, %v241
  %243 = vmatmul.f32.gmra.mxu0 %v175
  %v244 = vpop.f32.mrf.mxu0
  %v245 = vadd.f32 0.0, %v244
  %246 = vmatmul.f32.gmra.mxu0 %v178
  %v247 = vpop.f32.mrf.mxu0
  %v248 = vadd.f32 0.0, %v247
  %249 = vmatmul.f32.gmra.mxu0 %v181
  %v250 = vpop.f32.mrf.mxu0
  %v251 = vadd.f32 0.0, %v250
  %252 = vdwg.mxu0
  %v254 = vsel %vm53, %v132, 0
  %v257 = vsel %vm53, %v135, 0
  %259 = vmatpush.xpose.msra.mxu0 0.0
  %260 = vmatpush.xpose.msra.mxu0 0.0
  %261 = vmatpush.xpose.msra.mxu0 0.0
  %262 = vmatpush.xpose.msra.mxu0 0.0
  %263 = vmatpush.xpose.msra.mxu0 0.0
  %264 = vmatpush.xpose.msra.mxu0 0.0
  %265 = vmatpush.xpose.msra.mxu0 0.0
  %266 = vmatpush.xpose.msra.mxu0 0.0
  %267 = vmatpush.xpose.msra.mxu0 0.0
  %268 = vmatpush.xpose.msra.mxu0 0.0
  %269 = vmatpush.xpose.msra.mxu0 0.0
  %270 = vmatpush.xpose.msra.mxu0 0.0
  %271 = vmatpush.xpose.msra.mxu0 0.0
  %272 = vmatpush.xpose.msra.mxu0 0.0
  %273 = vmatpush.xpose.msra.mxu0 %v257
  %274 = vmatpush.xpose.msra.mxu0 %v254
  %275 = vmatmul.f32.gmra.mxu0 %v172
  %v276 = vpop.f32.mrf.mxu0
  %v277 = vadd.f32 0.0, %v276
  %278 = vmatmul.f32.gmra.mxu0 %v175
  %v279 = vpop.f32.mrf.mxu0
  %v280 = vadd.f32 0.0, %v279
  %281 = vmatmul.f32.gmra.mxu0 %v178
  %v282 = vpop.f32.mrf.mxu0
  %v283 = vadd.f32 0.0, %v282
  %284 = vmatmul.f32.gmra.mxu0 %v181
  %v285 = vpop.f32.mrf.mxu0
  %v286 = vadd.f32 0.0, %v285
  %287 = vdwg.mxu0
  %v289 = vsel %vm53, %v138, 0
  %v292 = vsel %vm53, %v141, 0
  %294 = vmatpush.xpose.msra.mxu0 0.0
  %295 = vmatpush.xpose.msra.mxu0 0.0
  %296 = vmatpush.xpose.msra.mxu0 0.0
  %297 = vmatpush.xpose.msra.mxu0 0.0
  %298 = vmatpush.xpose.msra.mxu0 0.0
  %299 = vmatpush.xpose.msra.mxu0 0.0
  %300 = vmatpush.xpose.msra.mxu0 0.0
  %301 = vmatpush.xpose.msra.mxu0 0.0
  %302 = vmatpush.xpose.msra.mxu0 0.0
  %303 = vmatpush.xpose.msra.mxu0 0.0
  %304 = vmatpush.xpose.msra.mxu0 0.0
  %305 = vmatpush.xpose.msra.mxu0 0.0
  %306 = vmatpush.xpose.msra.mxu0 0.0
  %307 = vmatpush.xpose.msra.mxu0 0.0
  %308 = vmatpush.xpose.msra.mxu0 %v292
  %309 = vmatpush.xpose.msra.mxu0 %v289
  %310 = vmatmul.f32.gmra.mxu0 %v172
  %v311 = vpop.f32.mrf.mxu0
  %v312 = vadd.f32 0.0, %v311
  %313 = vmatmul.f32.gmra.mxu0 %v175
  %v314 = vpop.f32.mrf.mxu0
  %v315 = vadd.f32 0.0, %v314
  %316 = vmatmul.f32.gmra.mxu0 %v178
  %v317 = vpop.f32.mrf.mxu0
  %v318 = vadd.f32 0.0, %v317
  %319 = vmatmul.f32.gmra.mxu0 %v181
  %v320 = vpop.f32.mrf.mxu0
  %v321 = vadd.f32 0.0, %v320
  %322 = vdwg.mxu0
  %v324 = vsel %vm53, %v144, 0
  %v327 = vsel %vm53, %v147, 0
  %329 = vmatpush.xpose.msra.mxu0 0.0
  %330 = vmatpush.xpose.msra.mxu0 0.0
  %331 = vmatpush.xpose.msra.mxu0 0.0
  %332 = vmatpush.xpose.msra.mxu0 0.0
  %333 = vmatpush.xpose.msra.mxu0 0.0
  %334 = vmatpush.xpose.msra.mxu0 0.0
  %335 = vmatpush.xpose.msra.mxu0 0.0
  %336 = vmatpush.xpose.msra.mxu0 0.0
  %337 = vmatpush.xpose.msra.mxu0 0.0
  %338 = vmatpush.xpose.msra.mxu0 0.0
  %339 = vmatpush.xpose.msra.mxu0 0.0
  %340 = vmatpush.xpose.msra.mxu0 0.0
  %341 = vmatpush.xpose.msra.mxu0 0.0
  %342 = vmatpush.xpose.msra.mxu0 0.0
  %343 = vmatpush.xpose.msra.mxu0 %v327
  %344 = vmatpush.xpose.msra.mxu0 %v324
  %345 = vmatmul.f32.gmra.mxu0 %v172
  %v346 = vpop.f32.mrf.mxu0
  %v347 = vadd.f32 0.0, %v346
  %348 = vmatmul.f32.gmra.mxu0 %v175
  %v349 = vpop.f32.mrf.mxu0
  %v350 = vadd.f32 0.0, %v349
  %351 = vmatmul.f32.gmra.mxu0 %v178
  %v352 = vpop.f32.mrf.mxu0
  %v353 = vadd.f32 0.0, %v352
  %354 = vmatmul.f32.gmra.mxu0 %v181
  %v355 = vpop.f32.mrf.mxu0
  %v356 = vadd.f32 0.0, %v355
  %357 = vdwg.mxu0
  %v359 = vsel %vm53, %v150, 0
  %v362 = vsel %vm53, %v153, 0
  %364 = vmatpush.xpose.msra.mxu0 0.0
  %365 = vmatpush.xpose.msra.mxu0 0.0
  %366 = vmatpush.xpose.msra.mxu0 0.0
  %367 = vmatpush.xpose.msra.mxu0 0.0
  %368 = vmatpush.xpose.msra.mxu0 0.0
  %369 = vmatpush.xpose.msra.mxu0 0.0
  %370 = vmatpush.xpose.msra.mxu0 0.0
  %371 = vmatpush.xpose.msra.mxu0 0.0
  %372 = vmatpush.xpose.msra.mxu0 0.0
  %373 = vmatpush.xpose.msra.mxu0 0.0
  %374 = vmatpush.xpose.msra.mxu0 0.0
  %375 = vmatpush.xpose.msra.mxu0 0.0
  %376 = vmatpush.xpose.msra.mxu0 0.0
  %377 = vmatpush.xpose.msra.mxu0 0.0
  %378 = vmatpush.xpose.msra.mxu0 %v362
  %379 = vmatpush.xpose.msra.mxu0 %v359
  %380 = vmatmul.f32.gmra.mxu0 %v172
  %v381 = vpop.f32.mrf.mxu0
  %v382 = vadd.f32 0.0, %v381
  %383 = vmatmul.f32.gmra.mxu0 %v175
  %v384 = vpop.f32.mrf.mxu0
  %v385 = vadd.f32 0.0, %v384
  %386 = vmatmul.f32.gmra.mxu0 %v178
  %v387 = vpop.f32.mrf.mxu0
  %v388 = vadd.f32 0.0, %v387
  %389 = vmatmul.f32.gmra.mxu0 %v181
  %v390 = vpop.f32.mrf.mxu0
  %v391 = vadd.f32 0.0, %v390
  %392 = vdwg.mxu0
  %v394 = vsel %vm53, %v156, 0
  %v397 = vsel %vm53, %v159, 0
  %399 = vmatpush.xpose.msra.mxu0 0.0
  %400 = vmatpush.xpose.msra.mxu0 0.0
  %401 = vmatpush.xpose.msra.mxu0 0.0
  %402 = vmatpush.xpose.msra.mxu0 0.0
  %403 = vmatpush.xpose.msra.mxu0 0.0
  %404 = vmatpush.xpose.msra.mxu0 0.0
  %405 = vmatpush.xpose.msra.mxu0 0.0
  %406 = vmatpush.xpose.msra.mxu0 0.0
  %407 = vmatpush.xpose.msra.mxu0 0.0
  %408 = vmatpush.xpose.msra.mxu0 0.0
  %409 = vmatpush.xpose.msra.mxu0 0.0
  %410 = vmatpush.xpose.msra.mxu0 0.0
  %411 = vmatpush.xpose.msra.mxu0 0.0
  %412 = vmatpush.xpose.msra.mxu0 0.0
  %413 = vmatpush.xpose.msra.mxu0 %v397
  %414 = vmatpush.xpose.msra.mxu0 %v394
  %415 = vmatmul.f32.gmra.mxu0 %v172
  %v416 = vpop.f32.mrf.mxu0
  %v417 = vadd.f32 0.0, %v416
  %418 = vmatmul.f32.gmra.mxu0 %v175
  %v419 = vpop.f32.mrf.mxu0
  %v420 = vadd.f32 0.0, %v419
  %421 = vmatmul.f32.gmra.mxu0 %v178
  %v422 = vpop.f32.mrf.mxu0
  %v423 = vadd.f32 0.0, %v422
  %424 = vmatmul.f32.gmra.mxu0 %v181
  %v425 = vpop.f32.mrf.mxu0
  %v426 = vadd.f32 0.0, %v425
  %427 = vdwg.mxu0
  %v429 = vsel %vm53, %v162, 0
  %v432 = vsel %vm53, %v165, 0
  %434 = vmatpush.xpose.msra.mxu0 0.0
  %435 = vmatpush.xpose.msra.mxu0 0.0
  %436 = vmatpush.xpose.msra.mxu0 0.0
  %437 = vmatpush.xpose.msra.mxu0 0.0
  %438 = vmatpush.xpose.msra.mxu0 0.0
  %439 = vmatpush.xpose.msra.mxu0 0.0
  %440 = vmatpush.xpose.msra.mxu0 0.0
  %441 = vmatpush.xpose.msra.mxu0 0.0
  %442 = vmatpush.xpose.msra.mxu0 0.0
  %443 = vmatpush.xpose.msra.mxu0 0.0
  %444 = vmatpush.xpose.msra.mxu0 0.0
  %445 = vmatpush.xpose.msra.mxu0 0.0
  %446 = vmatpush.xpose.msra.mxu0 0.0
  %447 = vmatpush.xpose.msra.mxu0 0.0
  %448 = vmatpush.xpose.msra.mxu0 %v432
  %449 = vmatpush.xpose.msra.mxu0 %v429
  %450 = vmatmul.f32.gmra.mxu0 %v172
  %v451 = vpop.f32.mrf.mxu0
  %v452 = vadd.f32 0.0, %v451
  %453 = vmatmul.f32.gmra.mxu0 %v175
  %v454 = vpop.f32.mrf.mxu0
  %v455 = vadd.f32 0.0, %v454
  %456 = vmatmul.f32.gmra.mxu0 %v178
  %v457 = vpop.f32.mrf.mxu0
  %v458 = vadd.f32 0.0, %v457
  %459 = vmatmul.f32.gmra.mxu0 %v181
  %v460 = vpop.f32.mrf.mxu0
  %v461 = vadd.f32 0.0, %v460
  %462 = vdwg.mxu0
  %vm463 = vcmask 130048
  %v464 = vsel %vm463, %v207, -inf
  %465 = vmax.xlane.f32.xlu0 %v464
  %v466 = vpop.xlane.xlu0 %465
  %v467 = vsel %vm463, %v210, -inf
  %468 = vmax.xlane.f32.xlu0 %v467
  %v469 = vpop.xlane.xlu0 %468
  %v470 = vsel %vm463, %v213, -inf
  %471 = vmax.xlane.f32.xlu0 %v470
  %v472 = vpop.xlane.xlu0 %471
  %v473 = vsel %vm463, %v216, -inf
  %474 = vmax.xlane.f32.xlu0 %v473
  %v475 = vpop.xlane.xlu0 %474
  %v476 = vsel %vm463, %v242, -inf
  %477 = vmax.xlane.f32.xlu0 %v476
  %v478 = vpop.xlane.xlu0 %477
  %v479 = vsel %vm463, %v245, -inf
  %480 = vmax.xlane.f32.xlu0 %v479
  %v481 = vpop.xlane.xlu0 %480
  %v482 = vsel %vm463, %v248, -inf
  %483 = vmax.xlane.f32.xlu0 %v482
  %v484 = vpop.xlane.xlu0 %483
  %v485 = vsel %vm463, %v251, -inf
  %486 = vmax.xlane.f32.xlu0 %v485
  %v487 = vpop.xlane.xlu0 %486
  %v488 = vsel %vm463, %v277, -inf
  %489 = vmax.xlane.f32.xlu0 %v488
  %v490 = vpop.xlane.xlu0 %489
  %v491 = vsel %vm463, %v280, -inf
  %492 = vmax.xlane.f32.xlu0 %v491
  %v493 = vpop.xlane.xlu0 %492
  %v494 = vsel %vm463, %v283, -inf
  %495 = vmax.xlane.f32.xlu0 %v494
  %v496 = vpop.xlane.xlu0 %495
  %v497 = vsel %vm463, %v286, -inf
  %498 = vmax.xlane.f32.xlu0 %v497
  %v499 = vpop.xlane.xlu0 %498
  %v500 = vsel %vm463, %v312, -inf
  %501 = vmax.xlane.f32.xlu0 %v500
  %v502 = vpop.xlane.xlu0 %501
  %v503 = vsel %vm463, %v315, -inf
  %504 = vmax.xlane.f32.xlu0 %v503
  %v505 = vpop.xlane.xlu0 %504
  %v506 = vsel %vm463, %v318, -inf
  %507 = vmax.xlane.f32.xlu0 %v506
  %v508 = vpop.xlane.xlu0 %507
  %v509 = vsel %vm463, %v321, -inf
  %510 = vmax.xlane.f32.xlu0 %v509
  %v511 = vpop.xlane.xlu0 %510
  %v512 = vsel %vm463, %v347, -inf
  %513 = vmax.xlane.f32.xlu0 %v512
  %v514 = vpop.xlane.xlu0 %513
  %v515 = vsel %vm463, %v350, -inf
  %516 = vmax.xlane.f32.xlu0 %v515
  %v517 = vpop.xlane.xlu0 %516
  %v518 = vsel %vm463, %v353, -inf
  %519 = vmax.xlane.f32.xlu0 %v518
  %v520 = vpop.xlane.xlu0 %519
  %v521 = vsel %vm463, %v356, -inf
  %522 = vmax.xlane.f32.xlu0 %v521
  %v523 = vpop.xlane.xlu0 %522
  %v524 = vsel %vm463, %v382, -inf
  %525 = vmax.xlane.f32.xlu0 %v524
  %v526 = vpop.xlane.xlu0 %525
  %v527 = vsel %vm463, %v385, -inf
  %528 = vmax.xlane.f32.xlu0 %v527
  %v529 = vpop.xlane.xlu0 %528
  %v530 = vsel %vm463, %v388, -inf
  %531 = vmax.xlane.f32.xlu0 %v530
  %v532 = vpop.xlane.xlu0 %531
  %v533 = vsel %vm463, %v391, -inf
  %534 = vmax.xlane.f32.xlu0 %v533
  %v535 = vpop.xlane.xlu0 %534
  %v536 = vsel %vm463, %v417, -inf
  %537 = vmax.xlane.f32.xlu0 %v536
  %v538 = vpop.xlane.xlu0 %537
  %v539 = vsel %vm463, %v420, -inf
  %540 = vmax.xlane.f32.xlu0 %v539
  %v541 = vpop.xlane.xlu0 %540
  %v542 = vsel %vm463, %v423, -inf
  %543 = vmax.xlane.f32.xlu0 %v542
  %v544 = vpop.xlane.xlu0 %543
  %v545 = vsel %vm463, %v426, -inf
  %546 = vmax.xlane.f32.xlu0 %v545
  %v547 = vpop.xlane.xlu0 %546
  %v548 = vsel %vm463, %v452, -inf
  %549 = vmax.xlane.f32.xlu0 %v548
  %v550 = vpop.xlane.xlu0 %549
  %v551 = vsel %vm463, %v455, -inf
  %552 = vmax.xlane.f32.xlu0 %v551
  %v553 = vpop.xlane.xlu0 %552
  %v554 = vsel %vm463, %v458, -inf
  %555 = vmax.xlane.f32.xlu0 %v554
  %v556 = vpop.xlane.xlu0 %555
  %v557 = vsel %vm463, %v461, -inf
  %558 = vmax.xlane.f32.xlu0 %v557
  %v559 = vpop.xlane.xlu0 %558
  %v560 = vsub.f32 %v207, %v466
  %v561 = vsub.f32 %v210, %v469
  %v562 = vsub.f32 %v213, %v472
  %v563 = vsub.f32 %v216, %v475
  %v564 = vsub.f32 %v242, %v478
  %v565 = vsub.f32 %v245, %v481
  %v566 = vsub.f32 %v248, %v484
  %v567 = vsub.f32 %v251, %v487
  %v568 = vsub.f32 %v277, %v490
  %v569 = vsub.f32 %v280, %v493
  %v570 = vsub.f32 %v283, %v496
  %v571 = vsub.f32 %v286, %v499
  %v572 = vsub.f32 %v312, %v502
  %v573 = vsub.f32 %v315, %v505
  %v574 = vsub.f32 %v318, %v508
  %v575 = vsub.f32 %v321, %v511
  %v576 = vsub.f32 %v347, %v514
  %v577 = vsub.f32 %v350, %v517
  %v578 = vsub.f32 %v353, %v520
  %v579 = vsub.f32 %v356, %v523
  %v580 = vsub.f32 %v382, %v526
  %v581 = vsub.f32 %v385, %v529
  %v582 = vsub.f32 %v388, %v532
  %v583 = vsub.f32 %v391, %v535
  %v584 = vsub.f32 %v417, %v538
  %v585 = vsub.f32 %v420, %v541
  %v586 = vsub.f32 %v423, %v544
  %v587 = vsub.f32 %v426, %v547
  %v588 = vsub.f32 %v452, %v550
  %v589 = vsub.f32 %v455, %v553
  %v590 = vsub.f32 %v458, %v556
  %v591 = vsub.f32 %v461, %v559
  %v592 = vmul.f32 %v560, 1.442695
  %v593 = vpow.pop %v592
  %v594 = vmul.f32 %v561, 1.442695
  %v595 = vpow.pop %v594
  %v596 = vmul.f32 %v562, 1.442695
  %v597 = vpow.pop %v596
  %v598 = vmul.f32 %v563, 1.442695
  %v599 = vpow.pop %v598
  %v600 = vmul.f32 %v564, 1.442695
  %v601 = vpow.pop %v600
  %v602 = vmul.f32 %v565, 1.442695
  %v603 = vpow.pop %v602
  %v604 = vmul.f32 %v566, 1.442695
  %v605 = vpow.pop %v604
  %v606 = vmul.f32 %v567, 1.442695
  %v607 = vpow.pop %v606
  %v608 = vmul.f32 %v568, 1.442695
  %v609 = vpow.pop %v608
  %v610 = vmul.f32 %v569, 1.442695
  %v611 = vpow.pop %v610
  %v612 = vmul.f32 %v570, 1.442695
  %v613 = vpow.pop %v612
  %v614 = vmul.f32 %v571, 1.442695
  %v615 = vpow.pop %v614
  %v616 = vmul.f32 %v572, 1.442695
  %v617 = vpow.pop %v616
  %v618 = vmul.f32 %v573, 1.442695
  %v619 = vpow.pop %v618
  %v620 = vmul.f32 %v574, 1.442695
  %v621 = vpow.pop %v620
  %v622 = vmul.f32 %v575, 1.442695
  %v623 = vpow.pop %v622
  %v624 = vmul.f32 %v576, 1.442695
  %v625 = vpow.pop %v624
  %v626 = vmul.f32 %v577, 1.442695
  %v627 = vpow.pop %v626
  %v628 = vmul.f32 %v578, 1.442695
  %v629 = vpow.pop %v628
  %v630 = vmul.f32 %v579, 1.442695
  %v631 = vpow.pop %v630
  %v632 = vmul.f32 %v580, 1.442695
  %v633 = vpow.pop %v632
  %v634 = vmul.f32 %v581, 1.442695
  %v635 = vpow.pop %v634
  %v636 = vmul.f32 %v582, 1.442695
  %v637 = vpow.pop %v636
  %v638 = vmul.f32 %v583, 1.442695
  %v639 = vpow.pop %v638
  %v640 = vmul.f32 %v584, 1.442695
  %v641 = vpow.pop %v640
  %v642 = vmul.f32 %v585, 1.442695
  %v643 = vpow.pop %v642
  %v644 = vmul.f32 %v586, 1.442695
  %v645 = vpow.pop %v644
  %v646 = vmul.f32 %v587, 1.442695
  %v647 = vpow.pop %v646
  %v648 = vmul.f32 %v588, 1.442695
  %v649 = vpow.pop %v648
  %v650 = vmul.f32 %v589, 1.442695
  %v651 = vpow.pop %v650
  %v652 = vmul.f32 %v590, 1.442695
  %v653 = vpow.pop %v652
  %v654 = vmul.f32 %v591, 1.442695
  %v655 = vpow.pop %v654
  %v656 = vsel %vm463, %v593, 0.0
  %657 = vadd.xlane.f32.xlu0 %v656
  %v658 = vpop.xlane.xlu0 %657
  %v659 = vsel %vm463, %v595, 0.0
  %660 = vadd.xlane.f32.xlu0 %v659
  %v661 = vpop.xlane.xlu0 %660
  %v662 = vsel %vm463, %v597, 0.0
  %663 = vadd.xlane.f32.xlu0 %v662
  %v664 = vpop.xlane.xlu0 %663
  %v665 = vsel %vm463, %v599, 0.0
  %666 = vadd.xlane.f32.xlu0 %v665
  %v667 = vpop.xlane.xlu0 %666
  %v668 = vsel %vm463, %v601, 0.0
  %669 = vadd.xlane.f32.xlu0 %v668
  %v670 = vpop.xlane.xlu0 %669
  %v671 = vsel %vm463, %v603, 0.0
  %672 = vadd.xlane.f32.xlu0 %v671
  %v673 = vpop.xlane.xlu0 %672
  %v674 = vsel %vm463, %v605, 0.0
  %675 = vadd.xlane.f32.xlu0 %v674
  %v676 = vpop.xlane.xlu0 %675
  %v677 = vsel %vm463, %v607, 0.0
  %678 = vadd.xlane.f32.xlu0 %v677
  %v679 = vpop.xlane.xlu0 %678
  %v680 = vsel %vm463, %v609, 0.0
  %681 = vadd.xlane.f32.xlu0 %v680
  %v682 = vpop.xlane.xlu0 %681
  %v683 = vsel %vm463, %v611, 0.0
  %684 = vadd.xlane.f32.xlu0 %v683
  %v685 = vpop.xlane.xlu0 %684
  %v686 = vsel %vm463, %v613, 0.0
  %687 = vadd.xlane.f32.xlu0 %v686
  %v688 = vpop.xlane.xlu0 %687
  %v689 = vsel %vm463, %v615, 0.0
  %690 = vadd.xlane.f32.xlu0 %v689
  %v691 = vpop.xlane.xlu0 %690
  %v692 = vsel %vm463, %v617, 0.0
  %693 = vadd.xlane.f32.xlu0 %v692
  %v694 = vpop.xlane.xlu0 %693
  %v695 = vsel %vm463, %v619, 0.0
  %696 = vadd.xlane.f32.xlu0 %v695
  %v697 = vpop.xlane.xlu0 %696
  %v698 = vsel %vm463, %v621, 0.0
  %699 = vadd.xlane.f32.xlu0 %v698
  %v700 = vpop.xlane.xlu0 %699
  %v701 = vsel %vm463, %v623, 0.0
  %702 = vadd.xlane.f32.xlu0 %v701
  %v703 = vpop.xlane.xlu0 %702
  %v704 = vsel %vm463, %v625, 0.0
  %705 = vadd.xlane.f32.xlu0 %v704
  %v706 = vpop.xlane.xlu0 %705
  %v707 = vsel %vm463, %v627, 0.0
  %708 = vadd.xlane.f32.xlu0 %v707
  %v709 = vpop.xlane.xlu0 %708
  %v710 = vsel %vm463, %v629, 0.0
  %711 = vadd.xlane.f32.xlu0 %v710
  %v712 = vpop.xlane.xlu0 %711
  %v713 = vsel %vm463, %v631, 0.0
  %714 = vadd.xlane.f32.xlu0 %v713
  %v715 = vpop.xlane.xlu0 %714
  %v716 = vsel %vm463, %v633, 0.0
  %717 = vadd.xlane.f32.xlu0 %v716
  %v718 = vpop.xlane.xlu0 %717
  %v719 = vsel %vm463, %v635, 0.0
  %720 = vadd.xlane.f32.xlu0 %v719
  %v721 = vpop.xlane.xlu0 %720
  %v722 = vsel %vm463, %v637, 0.0
  %723 = vadd.xlane.f32.xlu0 %v722
  %v724 = vpop.xlane.xlu0 %723
  %v725 = vsel %vm463, %v639, 0.0
  %726 = vadd.xlane.f32.xlu0 %v725
  %v727 = vpop.xlane.xlu0 %726
  %v728 = vsel %vm463, %v641, 0.0
  %729 = vadd.xlane.f32.xlu0 %v728
  %v730 = vpop.xlane.xlu0 %729
  %v731 = vsel %vm463, %v643, 0.0
  %732 = vadd.xlane.f32.xlu0 %v731
  %v733 = vpop.xlane.xlu0 %732
  %v734 = vsel %vm463, %v645, 0.0
  %735 = vadd.xlane.f32.xlu0 %v734
  %v736 = vpop.xlane.xlu0 %735
  %v737 = vsel %vm463, %v647, 0.0
  %738 = vadd.xlane.f32.xlu0 %v737
  %v739 = vpop.xlane.xlu0 %738
  %v740 = vsel %vm463, %v649, 0.0
  %741 = vadd.xlane.f32.xlu0 %v740
  %v742 = vpop.xlane.xlu0 %741
  %v743 = vsel %vm463, %v651, 0.0
  %744 = vadd.xlane.f32.xlu0 %v743
  %v745 = vpop.xlane.xlu0 %744
  %v746 = vsel %vm463, %v653, 0.0
  %747 = vadd.xlane.f32.xlu0 %v746
  %v748 = vpop.xlane.xlu0 %747
  %v749 = vsel %vm463, %v655, 0.0
  %750 = vadd.xlane.f32.xlu0 %v749
  %v751 = vpop.xlane.xlu0 %750
  %v752 = vrcp.pop %v658
  %v753 = vmul.f32 %v658, %v752
  %v754 = vsub.f32 1.0, %v753
  %v755 = vmul.f32 %v752, %v754
  %v756 = vadd.f32 %v752, %v755
  %vm757 = vweird.f32 %v658
  %vm758 = vweird.f32 %v752
  %vm759 = vmor %vm757, %vm758
  %v760 = vsel %vm759, %v752, %v756
  %v761 = vand.u32 2147483647, %v658
  %vm762 = vcmp.eq.f32.partialorder %v761, 8.507059e+37
  %v763 = vand.u32 %v658, 2147483648
  %v764 = vor.u32 1.1754944e-38, %v763
  %v765 = vsel %vm762, %v764, %v760
  %v766 = vmul.f32 %v593, %v765
  %v767 = vrcp.pop %v661
  %v768 = vmul.f32 %v661, %v767
  %v769 = vsub.f32 1.0, %v768
  %v770 = vmul.f32 %v767, %v769
  %v771 = vadd.f32 %v767, %v770
  %vm772 = vweird.f32 %v661
  %vm773 = vweird.f32 %v767
  %vm774 = vmor %vm772, %vm773
  %v775 = vsel %vm774, %v767, %v771
  %v776 = vand.u32 2147483647, %v661
  %vm777 = vcmp.eq.f32.partialorder %v776, 8.507059e+37
  %v778 = vand.u32 %v661, 2147483648
  %v779 = vor.u32 1.1754944e-38, %v778
  %v780 = vsel %vm777, %v779, %v775
  %v781 = vmul.f32 %v595, %v780
  %v782 = vrcp.pop %v664
  %v783 = vmul.f32 %v664, %v782
  %v784 = vsub.f32 1.0, %v783
  %v785 = vmul.f32 %v782, %v784
  %v786 = vadd.f32 %v782, %v785
  %vm787 = vweird.f32 %v664
  %vm788 = vweird.f32 %v782
  %vm789 = vmor %vm787, %vm788
  %v790 = vsel %vm789, %v782, %v786
  %v791 = vand.u32 2147483647, %v664
  %vm792 = vcmp.eq.f32.partialorder %v791, 8.507059e+37
  %v793 = vand.u32 %v664, 2147483648
  %v794 = vor.u32 1.1754944e-38, %v793
  %v795 = vsel %vm792, %v794, %v790
  %v796 = vmul.f32 %v597, %v795
  %v797 = vrcp.pop %v667
  %v798 = vmul.f32 %v667, %v797
  %v799 = vsub.f32 1.0, %v798
  %v800 = vmul.f32 %v797, %v799
  %v801 = vadd.f32 %v797, %v800
  %vm802 = vweird.f32 %v667
  %vm803 = vweird.f32 %v797
  %vm804 = vmor %vm802, %vm803
  %v805 = vsel %vm804, %v797, %v801
  %v806 = vand.u32 2147483647, %v667
  %vm807 = vcmp.eq.f32.partialorder %v806, 8.507059e+37
  %v808 = vand.u32 %v667, 2147483648
  %v809 = vor.u32 1.1754944e-38, %v808
  %v810 = vsel %vm807, %v809, %v805
  %v811 = vmul.f32 %v599, %v810
  %v812 = vrcp.pop %v670
  %v813 = vmul.f32 %v670, %v812
  %v814 = vsub.f32 1.0, %v813
  %v815 = vmul.f32 %v812, %v814
  %v816 = vadd.f32 %v812, %v815
  %vm817 = vweird.f32 %v670
  %vm818 = vweird.f32 %v812
  %vm819 = vmor %vm817, %vm818
  %v820 = vsel %vm819, %v812, %v816
  %v821 = vand.u32 2147483647, %v670
  %vm822 = vcmp.eq.f32.partialorder %v821, 8.507059e+37
  %v823 = vand.u32 %v670, 2147483648
  %v824 = vor.u32 1.1754944e-38, %v823
  %v825 = vsel %vm822, %v824, %v820
  %v826 = vmul.f32 %v601, %v825
  %v827 = vrcp.pop %v673
  %v828 = vmul.f32 %v673, %v827
  %v829 = vsub.f32 1.0, %v828
  %v830 = vmul.f32 %v827, %v829
  %v831 = vadd.f32 %v827, %v830
  %vm832 = vweird.f32 %v673
  %vm833 = vweird.f32 %v827
  %vm834 = vmor %vm832, %vm833
  %v835 = vsel %vm834, %v827, %v831
  %v836 = vand.u32 2147483647, %v673
  %vm837 = vcmp.eq.f32.partialorder %v836, 8.507059e+37
  %v838 = vand.u32 %v673, 2147483648
  %v839 = vor.u32 1.1754944e-38, %v838
  %v840 = vsel %vm837, %v839, %v835
  %v841 = vmul.f32 %v603, %v840
  %v842 = vrcp.pop %v676
  %v843 = vmul.f32 %v676, %v842
  %v844 = vsub.f32 1.0, %v843
  %v845 = vmul.f32 %v842, %v844
  %v846 = vadd.f32 %v842, %v845
  %vm847 = vweird.f32 %v676
  %vm848 = vweird.f32 %v842
  %vm849 = vmor %vm847, %vm848
  %v850 = vsel %vm849, %v842, %v846
  %v851 = vand.u32 2147483647, %v676
  %vm852 = vcmp.eq.f32.partialorder %v851, 8.507059e+37
  %v853 = vand.u32 %v676, 2147483648
  %v854 = vor.u32 1.1754944e-38, %v853
  %v855 = vsel %vm852, %v854, %v850
  %v856 = vmul.f32 %v605, %v855
  %v857 = vrcp.pop %v679
  %v858 = vmul.f32 %v679, %v857
  %v859 = vsub.f32 1.0, %v858
  %v860 = vmul.f32 %v857, %v859
  %v861 = vadd.f32 %v857, %v860
  %vm862 = vweird.f32 %v679
  %vm863 = vweird.f32 %v857
  %vm864 = vmor %vm862, %vm863
  %v865 = vsel %vm864, %v857, %v861
  %v866 = vand.u32 2147483647, %v679
  %vm867 = vcmp.eq.f32.partialorder %v866, 8.507059e+37
  %v868 = vand.u32 %v679, 2147483648
  %v869 = vor.u32 1.1754944e-38, %v868
  %v870 = vsel %vm867, %v869, %v865
  %v871 = vmul.f32 %v607, %v870
  %v872 = vrcp.pop %v682
  %v873 = vmul.f32 %v682, %v872
  %v874 = vsub.f32 1.0, %v873
  %v875 = vmul.f32 %v872, %v874
  %v876 = vadd.f32 %v872, %v875
  %vm877 = vweird.f32 %v682
  %vm878 = vweird.f32 %v872
  %vm879 = vmor %vm877, %vm878
  %v880 = vsel %vm879, %v872, %v876
  %v881 = vand.u32 2147483647, %v682
  %vm882 = vcmp.eq.f32.partialorder %v881, 8.507059e+37
  %v883 = vand.u32 %v682, 2147483648
  %v884 = vor.u32 1.1754944e-38, %v883
  %v885 = vsel %vm882, %v884, %v880
  %v886 = vmul.f32 %v609, %v885
  %v887 = vrcp.pop %v685
  %v888 = vmul.f32 %v685, %v887
  %v889 = vsub.f32 1.0, %v888
  %v890 = vmul.f32 %v887, %v889
  %v891 = vadd.f32 %v887, %v890
  %vm892 = vweird.f32 %v685
  %vm893 = vweird.f32 %v887
  %vm894 = vmor %vm892, %vm893
  %v895 = vsel %vm894, %v887, %v891
  %v896 = vand.u32 2147483647, %v685
  %vm897 = vcmp.eq.f32.partialorder %v896, 8.507059e+37
  %v898 = vand.u32 %v685, 2147483648
  %v899 = vor.u32 1.1754944e-38, %v898
  %v900 = vsel %vm897, %v899, %v895
  %v901 = vmul.f32 %v611, %v900
  %v902 = vrcp.pop %v688
  %v903 = vmul.f32 %v688, %v902
  %v904 = vsub.f32 1.0, %v903
  %v905 = vmul.f32 %v902, %v904
  %v906 = vadd.f32 %v902, %v905
  %vm907 = vweird.f32 %v688
  %vm908 = vweird.f32 %v902
  %vm909 = vmor %vm907, %vm908
  %v910 = vsel %vm909, %v902, %v906
  %v911 = vand.u32 2147483647, %v688
  %vm912 = vcmp.eq.f32.partialorder %v911, 8.507059e+37
  %v913 = vand.u32 %v688, 2147483648
  %v914 = vor.u32 1.1754944e-38, %v913
  %v915 = vsel %vm912, %v914, %v910
  %v916 = vmul.f32 %v613, %v915
  %v917 = vrcp.pop %v691
  %v918 = vmul.f32 %v691, %v917
  %v919 = vsub.f32 1.0, %v918
  %v920 = vmul.f32 %v917, %v919
  %v921 = vadd.f32 %v917, %v920
  %vm922 = vweird.f32 %v691
  %vm923 = vweird.f32 %v917
  %vm924 = vmor %vm922, %vm923
  %v925 = vsel %vm924, %v917, %v921
  %v926 = vand.u32 2147483647, %v691
  %vm927 = vcmp.eq.f32.partialorder %v926, 8.507059e+37
  %v928 = vand.u32 %v691, 2147483648
  %v929 = vor.u32 1.1754944e-38, %v928
  %v930 = vsel %vm927, %v929, %v925
  %v931 = vmul.f32 %v615, %v930
  %v932 = vrcp.pop %v694
  %v933 = vmul.f32 %v694, %v932
  %v934 = vsub.f32 1.0, %v933
  %v935 = vmul.f32 %v932, %v934
  %v936 = vadd.f32 %v932, %v935
  %vm937 = vweird.f32 %v694
  %vm938 = vweird.f32 %v932
  %vm939 = vmor %vm937, %vm938
  %v940 = vsel %vm939, %v932, %v936
  %v941 = vand.u32 2147483647, %v694
  %vm942 = vcmp.eq.f32.partialorder %v941, 8.507059e+37
  %v943 = vand.u32 %v694, 2147483648
  %v944 = vor.u32 1.1754944e-38, %v943
  %v945 = vsel %vm942, %v944, %v940
  %v946 = vmul.f32 %v617, %v945
  %v947 = vrcp.pop %v697
  %v948 = vmul.f32 %v697, %v947
  %v949 = vsub.f32 1.0, %v948
  %v950 = vmul.f32 %v947, %v949
  %v951 = vadd.f32 %v947, %v950
  %vm952 = vweird.f32 %v697
  %vm953 = vweird.f32 %v947
  %vm954 = vmor %vm952, %vm953
  %v955 = vsel %vm954, %v947, %v951
  %v956 = vand.u32 2147483647, %v697
  %vm957 = vcmp.eq.f32.partialorder %v956, 8.507059e+37
  %v958 = vand.u32 %v697, 2147483648
  %v959 = vor.u32 1.1754944e-38, %v958
  %v960 = vsel %vm957, %v959, %v955
  %v961 = vmul.f32 %v619, %v960
  %v962 = vrcp.pop %v700
  %v963 = vmul.f32 %v700, %v962
  %v964 = vsub.f32 1.0, %v963
  %v965 = vmul.f32 %v962, %v964
  %v966 = vadd.f32 %v962, %v965
  %vm967 = vweird.f32 %v700
  %vm968 = vweird.f32 %v962
  %vm969 = vmor %vm967, %vm968
  %v970 = vsel %vm969, %v962, %v966
  %v971 = vand.u32 2147483647, %v700
  %vm972 = vcmp.eq.f32.partialorder %v971, 8.507059e+37
  %v973 = vand.u32 %v700, 2147483648
  %v974 = vor.u32 1.1754944e-38, %v973
  %v975 = vsel %vm972, %v974, %v970
  %v976 = vmul.f32 %v621, %v975
  %v977 = vrcp.pop %v703
  %v978 = vmul.f32 %v703, %v977
  %v979 = vsub.f32 1.0, %v978
  %v980 = vmul.f32 %v977, %v979
  %v981 = vadd.f32 %v977, %v980
  %vm982 = vweird.f32 %v703
  %vm983 = vweird.f32 %v977
  %vm984 = vmor %vm982, %vm983
  %v985 = vsel %vm984, %v977, %v981
  %v986 = vand.u32 2147483647, %v703
  %vm987 = vcmp.eq.f32.partialorder %v986, 8.507059e+37
  %v988 = vand.u32 %v703, 2147483648
  %v989 = vor.u32 1.1754944e-38, %v988
  %v990 = vsel %vm987, %v989, %v985
  %v991 = vmul.f32 %v623, %v990
  %v992 = vrcp.pop %v706
  %v993 = vmul.f32 %v706, %v992
  %v994 = vsub.f32 1.0, %v993
  %v995 = vmul.f32 %v992, %v994
  %v996 = vadd.f32 %v992, %v995
  %vm997 = vweird.f32 %v706
  %vm998 = vweird.f32 %v992
  %vm999 = vmor %vm997, %vm998
  %v1000 = vsel %vm999, %v992, %v996
  %v1001 = vand.u32 2147483647, %v706
  %vm1002 = vcmp.eq.f32.partialorder %v1001, 8.507059e+37
  %v1003 = vand.u32 %v706, 2147483648
  %v1004 = vor.u32 1.1754944e-38, %v1003
  %v1005 = vsel %vm1002, %v1004, %v1000
  %v1006 = vmul.f32 %v625, %v1005
  %v1007 = vrcp.pop %v709
  %v1008 = vmul.f32 %v709, %v1007
  %v1009 = vsub.f32 1.0, %v1008
  %v1010 = vmul.f32 %v1007, %v1009
  %v1011 = vadd.f32 %v1007, %v1010
  %vm1012 = vweird.f32 %v709
  %vm1013 = vweird.f32 %v1007
  %vm1014 = vmor %vm1012, %vm1013
  %v1015 = vsel %vm1014, %v1007, %v1011
  %v1016 = vand.u32 2147483647, %v709
  %vm1017 = vcmp.eq.f32.partialorder %v1016, 8.507059e+37
  %v1018 = vand.u32 %v709, 2147483648
  %v1019 = vor.u32 1.1754944e-38, %v1018
  %v1020 = vsel %vm1017, %v1019, %v1015
  %v1021 = vmul.f32 %v627, %v1020
  %v1022 = vrcp.pop %v712
  %v1023 = vmul.f32 %v712, %v1022
  %v1024 = vsub.f32 1.0, %v1023
  %v1025 = vmul.f32 %v1022, %v1024
  %v1026 = vadd.f32 %v1022, %v1025
  %vm1027 = vweird.f32 %v712
  %vm1028 = vweird.f32 %v1022
  %vm1029 = vmor %vm1027, %vm1028
  %v1030 = vsel %vm1029, %v1022, %v1026
  %v1031 = vand.u32 2147483647, %v712
  %vm1032 = vcmp.eq.f32.partialorder %v1031, 8.507059e+37
  %v1033 = vand.u32 %v712, 2147483648
  %v1034 = vor.u32 1.1754944e-38, %v1033
  %v1035 = vsel %vm1032, %v1034, %v1030
  %v1036 = vmul.f32 %v629, %v1035
  %v1037 = vrcp.pop %v715
  %v1038 = vmul.f32 %v715, %v1037
  %v1039 = vsub.f32 1.0, %v1038
  %v1040 = vmul.f32 %v1037, %v1039
  %v1041 = vadd.f32 %v1037, %v1040
  %vm1042 = vweird.f32 %v715
  %vm1043 = vweird.f32 %v1037
  %vm1044 = vmor %vm1042, %vm1043
  %v1045 = vsel %vm1044, %v1037, %v1041
  %v1046 = vand.u32 2147483647, %v715
  %vm1047 = vcmp.eq.f32.partialorder %v1046, 8.507059e+37
  %v1048 = vand.u32 %v715, 2147483648
  %v1049 = vor.u32 1.1754944e-38, %v1048
  %v1050 = vsel %vm1047, %v1049, %v1045
  %v1051 = vmul.f32 %v631, %v1050
  %v1052 = vrcp.pop %v718
  %v1053 = vmul.f32 %v718, %v1052
  %v1054 = vsub.f32 1.0, %v1053
  %v1055 = vmul.f32 %v1052, %v1054
  %v1056 = vadd.f32 %v1052, %v1055
  %vm1057 = vweird.f32 %v718
  %vm1058 = vweird.f32 %v1052
  %vm1059 = vmor %vm1057, %vm1058
  %v1060 = vsel %vm1059, %v1052, %v1056
  %v1061 = vand.u32 2147483647, %v718
  %vm1062 = vcmp.eq.f32.partialorder %v1061, 8.507059e+37
  %v1063 = vand.u32 %v718, 2147483648
  %v1064 = vor.u32 1.1754944e-38, %v1063
  %v1065 = vsel %vm1062, %v1064, %v1060
  %v1066 = vmul.f32 %v633, %v1065
  %v1067 = vrcp.pop %v721
  %v1068 = vmul.f32 %v721, %v1067
  %v1069 = vsub.f32 1.0, %v1068
  %v1070 = vmul.f32 %v1067, %v1069
  %v1071 = vadd.f32 %v1067, %v1070
  %vm1072 = vweird.f32 %v721
  %vm1073 = vweird.f32 %v1067
  %vm1074 = vmor %vm1072, %vm1073
  %v1075 = vsel %vm1074, %v1067, %v1071
  %v1076 = vand.u32 2147483647, %v721
  %vm1077 = vcmp.eq.f32.partialorder %v1076, 8.507059e+37
  %v1078 = vand.u32 %v721, 2147483648
  %v1079 = vor.u32 1.1754944e-38, %v1078
  %v1080 = vsel %vm1077, %v1079, %v1075
  %v1081 = vmul.f32 %v635, %v1080
  %v1082 = vrcp.pop %v724
  %v1083 = vmul.f32 %v724, %v1082
  %v1084 = vsub.f32 1.0, %v1083
  %v1085 = vmul.f32 %v1082, %v1084
  %v1086 = vadd.f32 %v1082, %v1085
  %vm1087 = vweird.f32 %v724
  %vm1088 = vweird.f32 %v1082
  %vm1089 = vmor %vm1087, %vm1088
  %v1090 = vsel %vm1089, %v1082, %v1086
  %v1091 = vand.u32 2147483647, %v724
  %vm1092 = vcmp.eq.f32.partialorder %v1091, 8.507059e+37
  %v1093 = vand.u32 %v724, 2147483648
  %v1094 = vor.u32 1.1754944e-38, %v1093
  %v1095 = vsel %vm1092, %v1094, %v1090
  %v1096 = vmul.f32 %v637, %v1095
  %v1097 = vrcp.pop %v727
  %v1098 = vmul.f32 %v727, %v1097
  %v1099 = vsub.f32 1.0, %v1098
  %v1100 = vmul.f32 %v1097, %v1099
  %v1101 = vadd.f32 %v1097, %v1100
  %vm1102 = vweird.f32 %v727
  %vm1103 = vweird.f32 %v1097
  %vm1104 = vmor %vm1102, %vm1103
  %v1105 = vsel %vm1104, %v1097, %v1101
  %v1106 = vand.u32 2147483647, %v727
  %vm1107 = vcmp.eq.f32.partialorder %v1106, 8.507059e+37
  %v1108 = vand.u32 %v727, 2147483648
  %v1109 = vor.u32 1.1754944e-38, %v1108
  %v1110 = vsel %vm1107, %v1109, %v1105
  %v1111 = vmul.f32 %v639, %v1110
  %v1112 = vrcp.pop %v730
  %v1113 = vmul.f32 %v730, %v1112
  %v1114 = vsub.f32 1.0, %v1113
  %v1115 = vmul.f32 %v1112, %v1114
  %v1116 = vadd.f32 %v1112, %v1115
  %vm1117 = vweird.f32 %v730
  %vm1118 = vweird.f32 %v1112
  %vm1119 = vmor %vm1117, %vm1118
  %v1120 = vsel %vm1119, %v1112, %v1116
  %v1121 = vand.u32 2147483647, %v730
  %vm1122 = vcmp.eq.f32.partialorder %v1121, 8.507059e+37
  %v1123 = vand.u32 %v730, 2147483648
  %v1124 = vor.u32 1.1754944e-38, %v1123
  %v1125 = vsel %vm1122, %v1124, %v1120
  %v1126 = vmul.f32 %v641, %v1125
  %v1127 = vrcp.pop %v733
  %v1128 = vmul.f32 %v733, %v1127
  %v1129 = vsub.f32 1.0, %v1128
  %v1130 = vmul.f32 %v1127, %v1129
  %v1131 = vadd.f32 %v1127, %v1130
  %vm1132 = vweird.f32 %v733
  %vm1133 = vweird.f32 %v1127
  %vm1134 = vmor %vm1132, %vm1133
  %v1135 = vsel %vm1134, %v1127, %v1131
  %v1136 = vand.u32 2147483647, %v733
  %vm1137 = vcmp.eq.f32.partialorder %v1136, 8.507059e+37
  %v1138 = vand.u32 %v733, 2147483648
  %v1139 = vor.u32 1.1754944e-38, %v1138
  %v1140 = vsel %vm1137, %v1139, %v1135
  %v1141 = vmul.f32 %v643, %v1140
  %v1142 = vrcp.pop %v736
  %v1143 = vmul.f32 %v736, %v1142
  %v1144 = vsub.f32 1.0, %v1143
  %v1145 = vmul.f32 %v1142, %v1144
  %v1146 = vadd.f32 %v1142, %v1145
  %vm1147 = vweird.f32 %v736
  %vm1148 = vweird.f32 %v1142
  %vm1149 = vmor %vm1147, %vm1148
  %v1150 = vsel %vm1149, %v1142, %v1146
  %v1151 = vand.u32 2147483647, %v736
  %vm1152 = vcmp.eq.f32.partialorder %v1151, 8.507059e+37
  %v1153 = vand.u32 %v736, 2147483648
  %v1154 = vor.u32 1.1754944e-38, %v1153
  %v1155 = vsel %vm1152, %v1154, %v1150
  %v1156 = vmul.f32 %v645, %v1155
  %v1157 = vrcp.pop %v739
  %v1158 = vmul.f32 %v739, %v1157
  %v1159 = vsub.f32 1.0, %v1158
  %v1160 = vmul.f32 %v1157, %v1159
  %v1161 = vadd.f32 %v1157, %v1160
  %vm1162 = vweird.f32 %v739
  %vm1163 = vweird.f32 %v1157
  %vm1164 = vmor %vm1162, %vm1163
  %v1165 = vsel %vm1164, %v1157, %v1161
  %v1166 = vand.u32 2147483647, %v739
  %vm1167 = vcmp.eq.f32.partialorder %v1166, 8.507059e+37
  %v1168 = vand.u32 %v739, 2147483648
  %v1169 = vor.u32 1.1754944e-38, %v1168
  %v1170 = vsel %vm1167, %v1169, %v1165
  %v1171 = vmul.f32 %v647, %v1170
  %v1172 = vrcp.pop %v742
  %v1173 = vmul.f32 %v742, %v1172
  %v1174 = vsub.f32 1.0, %v1173
  %v1175 = vmul.f32 %v1172, %v1174
  %v1176 = vadd.f32 %v1172, %v1175
  %vm1177 = vweird.f32 %v742
  %vm1178 = vweird.f32 %v1172
  %vm1179 = vmor %vm1177, %vm1178
  %v1180 = vsel %vm1179, %v1172, %v1176
  %v1181 = vand.u32 2147483647, %v742
  %vm1182 = vcmp.eq.f32.partialorder %v1181, 8.507059e+37
  %v1183 = vand.u32 %v742, 2147483648
  %v1184 = vor.u32 1.1754944e-38, %v1183
  %v1185 = vsel %vm1182, %v1184, %v1180
  %v1186 = vmul.f32 %v649, %v1185
  %v1187 = vrcp.pop %v745
  %v1188 = vmul.f32 %v745, %v1187
  %v1189 = vsub.f32 1.0, %v1188
  %v1190 = vmul.f32 %v1187, %v1189
  %v1191 = vadd.f32 %v1187, %v1190
  %vm1192 = vweird.f32 %v745
  %vm1193 = vweird.f32 %v1187
  %vm1194 = vmor %vm1192, %vm1193
  %v1195 = vsel %vm1194, %v1187, %v1191
  %v1196 = vand.u32 2147483647, %v745
  %vm1197 = vcmp.eq.f32.partialorder %v1196, 8.507059e+37
  %v1198 = vand.u32 %v745, 2147483648
  %v1199 = vor.u32 1.1754944e-38, %v1198
  %v1200 = vsel %vm1197, %v1199, %v1195
  %v1201 = vmul.f32 %v651, %v1200
  %v1202 = vrcp.pop %v748
  %v1203 = vmul.f32 %v748, %v1202
  %v1204 = vsub.f32 1.0, %v1203
  %v1205 = vmul.f32 %v1202, %v1204
  %v1206 = vadd.f32 %v1202, %v1205
  %vm1207 = vweird.f32 %v748
  %vm1208 = vweird.f32 %v1202
  %vm1209 = vmor %vm1207, %vm1208
  %v1210 = vsel %vm1209, %v1202, %v1206
  %v1211 = vand.u32 2147483647, %v748
  %vm1212 = vcmp.eq.f32.partialorder %v1211, 8.507059e+37
  %v1213 = vand.u32 %v748, 2147483648
  %v1214 = vor.u32 1.1754944e-38, %v1213
  %v1215 = vsel %vm1212, %v1214, %v1210
  %v1216 = vmul.f32 %v653, %v1215
  %v1217 = vrcp.pop %v751
  %v1218 = vmul.f32 %v751, %v1217
  %v1219 = vsub.f32 1.0, %v1218
  %v1220 = vmul.f32 %v1217, %v1219
  %v1221 = vadd.f32 %v1217, %v1220
  %vm1222 = vweird.f32 %v751
  %vm1223 = vweird.f32 %v1217
  %vm1224 = vmor %vm1222, %vm1223
  %v1225 = vsel %vm1224, %v1217, %v1221
  %v1226 = vand.u32 2147483647, %v751
  %vm1227 = vcmp.eq.f32.partialorder %v1226, 8.507059e+37
  %v1228 = vand.u32 %v751, 2147483648
  %v1229 = vor.u32 1.1754944e-38, %v1228
  %v1230 = vsel %vm1227, %v1229, %v1225
  %v1231 = vmul.f32 %v655, %v1230
  %1232 = vrot.lane.b32.xlu0 %v120, 96
  %v1233 = vpop.permute.xlu0 %1232
  %1234 = vrot.lane.b32.xlu0 %v123, 96
  %v1235 = vpop.permute.xlu0 %1234
  %v1239 = vsel %vm463, %v766, 0
  %v1242 = vsel %vm463, %v781, 0
  %v1245 = vsel %vm463, %v796, 0
  %v1248 = vsel %vm463, %v811, 0
  %1250 = vmatpush.msra.mxu0 0.0
  %1251 = vmatpush.msra.mxu0 0.0
  %1252 = vmatpush.msra.mxu0 0.0
  %1253 = vmatpush.msra.mxu0 0.0
  %1254 = vmatpush.msra.mxu0 0.0
  %1255 = vmatpush.msra.mxu0 0.0
  %1256 = vmatpush.msra.mxu0 0.0
  %1257 = vmatpush.msra.mxu0 0.0
  %1258 = vmatpush.msra.mxu0 0.0
  %1259 = vmatpush.msra.mxu0 0.0
  %1260 = vmatpush.msra.mxu0 0.0
  %1261 = vmatpush.msra.mxu0 0.0
  %1262 = vmatpush.msra.mxu0 0.0
  %1263 = vmatpush.msra.mxu0 0.0
  %1264 = vmatpush.msra.mxu0 %v1235
  %1265 = vmatpush.msra.mxu0 %v1233
  %1266 = vmatmul.f32.gmra.mxu0 %v1239
  %v1267 = vpop.f32.mrf.mxu0
  %v1268 = vadd.f32 0.0, %v1267
  %1269 = vmatmul.f32.gmra.mxu0 %v1242
  %v1270 = vpop.f32.mrf.mxu0
  %v1271 = vadd.f32 0.0, %v1270
  %1272 = vmatmul.f32.gmra.mxu0 %v1245
  %v1273 = vpop.f32.mrf.mxu0
  %v1274 = vadd.f32 0.0, %v1273
  %1275 = vmatmul.f32.gmra.mxu0 %v1248
  %v1276 = vpop.f32.mrf.mxu0
  %v1277 = vadd.f32 0.0, %v1276
  %1278 = vdwg.mxu0
  %1279 = vrot.lane.b32.xlu0 %v126, 96
  %v1280 = vpop.permute.xlu0 %1279
  %1281 = vrot.lane.b32.xlu0 %v129, 96
  %v1282 = vpop.permute.xlu0 %1281
  %v1286 = vsel %vm463, %v826, 0
  %v1289 = vsel %vm463, %v841, 0
  %v1292 = vsel %vm463, %v856, 0
  %v1295 = vsel %vm463, %v871, 0
  %1297 = vmatpush.msra.mxu0 0.0
  %1298 = vmatpush.msra.mxu0 0.0
  %1299 = vmatpush.msra.mxu0 0.0
  %1300 = vmatpush.msra.mxu0 0.0
  %1301 = vmatpush.msra.mxu0 0.0
  %1302 = vmatpush.msra.mxu0 0.0
  %1303 = vmatpush.msra.mxu0 0.0
  %1304 = vmatpush.msra.mxu0 0.0
  %1305 = vmatpush.msra.mxu0 0.0
  %1306 = vmatpush.msra.mxu0 0.0
  %1307 = vmatpush.msra.mxu0 0.0
  %1308 = vmatpush.msra.mxu0 0.0
  %1309 = vmatpush.msra.mxu0 0.0
  %1310 = vmatpush.msra.mxu0 0.0
  %1311 = vmatpush.msra.mxu0 %v1282
  %1312 = vmatpush.msra.mxu0 %v1280
  %1313 = vmatmul.f32.gmra.mxu0 %v1286
  %v1314 = vpop.f32.mrf.mxu0
  %v1315 = vadd.f32 0.0, %v1314
  %1316 = vmatmul.f32.gmra.mxu0 %v1289
  %v1317 = vpop.f32.mrf.mxu0
  %v1318 = vadd.f32 0.0, %v1317
  %1319 = vmatmul.f32.gmra.mxu0 %v1292
  %v1320 = vpop.f32.mrf.mxu0
  %v1321 = vadd.f32 0.0, %v1320
  %1322 = vmatmul.f32.gmra.mxu0 %v1295
  %v1323 = vpop.f32.mrf.mxu0
  %v1324 = vadd.f32 0.0, %v1323
  %1325 = vdwg.mxu0
  %1326 = vrot.lane.b32.xlu0 %v132, 96
  %v1327 = vpop.permute.xlu0 %1326
  %1328 = vrot.lane.b32.xlu0 %v135, 96
  %v1329 = vpop.permute.xlu0 %1328
  %v1333 = vsel %vm463, %v886, 0
  %v1336 = vsel %vm463, %v901, 0
  %v1339 = vsel %vm463, %v916, 0
  %v1342 = vsel %vm463, %v931, 0
  %1344 = vmatpush.msra.mxu0 0.0
  %1345 = vmatpush.msra.mxu0 0.0
  %1346 = vmatpush.msra.mxu0 0.0
  %1347 = vmatpush.msra.mxu0 0.0
  %1348 = vmatpush.msra.mxu0 0.0
  %1349 = vmatpush.msra.mxu0 0.0
  %1350 = vmatpush.msra.mxu0 0.0
  %1351 = vmatpush.msra.mxu0 0.0
  %1352 = vmatpush.msra.mxu0 0.0
  %1353 = vmatpush.msra.mxu0 0.0
  %1354 = vmatpush.msra.mxu0 0.0
  %1355 = vmatpush.msra.mxu0 0.0
  %1356 = vmatpush.msra.mxu0 0.0
  %1357 = vmatpush.msra.mxu0 0.0
  %1358 = vmatpush.msra.mxu0 %v1329
  %1359 = vmatpush.msra.mxu0 %v1327
  %1360 = vmatmul.f32.gmra.mxu0 %v1333
  %v1361 = vpop.f32.mrf.mxu0
  %v1362 = vadd.f32 0.0, %v1361
  %1363 = vmatmul.f32.gmra.mxu0 %v1336
  %v1364 = vpop.f32.mrf.mxu0
  %v1365 = vadd.f32 0.0, %v1364
  %1366 = vmatmul.f32.gmra.mxu0 %v1339
  %v1367 = vpop.f32.mrf.mxu0
  %v1368 = vadd.f32 0.0, %v1367
  %1369 = vmatmul.f32.gmra.mxu0 %v1342
  %v1370 = vpop.f32.mrf.mxu0
  %v1371 = vadd.f32 0.0, %v1370
  %1372 = vdwg.mxu0
  %1373 = vrot.lane.b32.xlu0 %v138, 96
  %v1374 = vpop.permute.xlu0 %1373
  %1375 = vrot.lane.b32.xlu0 %v141, 96
  %v1376 = vpop.permute.xlu0 %1375
  %v1380 = vsel %vm463, %v946, 0
  %v1383 = vsel %vm463, %v961, 0
  %v1386 = vsel %vm463, %v976, 0
  %v1389 = vsel %vm463, %v991, 0
  %1391 = vmatpush.msra.mxu0 0.0
  %1392 = vmatpush.msra.mxu0 0.0
  %1393 = vmatpush.msra.mxu0 0.0
  %1394 = vmatpush.msra.mxu0 0.0
  %1395 = vmatpush.msra.mxu0 0.0
  %1396 = vmatpush.msra.mxu0 0.0
  %1397 = vmatpush.msra.mxu0 0.0
  %1398 = vmatpush.msra.mxu0 0.0
  %1399 = vmatpush.msra.mxu0 0.0
  %1400 = vmatpush.msra.mxu0 0.0
  %1401 = vmatpush.msra.mxu0 0.0
  %1402 = vmatpush.msra.mxu0 0.0
  %1403 = vmatpush.msra.mxu0 0.0
  %1404 = vmatpush.msra.mxu0 0.0
  %1405 = vmatpush.msra.mxu0 %v1376
  %1406 = vmatpush.msra.mxu0 %v1374
  %1407 = vmatmul.f32.gmra.mxu0 %v1380
  %v1408 = vpop.f32.mrf.mxu0
  %v1409 = vadd.f32 0.0, %v1408
  %1410 = vmatmul.f32.gmra.mxu0 %v1383
  %v1411 = vpop.f32.mrf.mxu0
  %v1412 = vadd.f32 0.0, %v1411
  %1413 = vmatmul.f32.gmra.mxu0 %v1386
  %v1414 = vpop.f32.mrf.mxu0
  %v1415 = vadd.f32 0.0, %v1414
  %1416 = vmatmul.f32.gmra.mxu0 %v1389
  %v1417 = vpop.f32.mrf.mxu0
  %v1418 = vadd.f32 0.0, %v1417
  %1419 = vdwg.mxu0
  %1420 = vrot.lane.b32.xlu0 %v144, 96
  %v1421 = vpop.permute.xlu0 %1420
  %1422 = vrot.lane.b32.xlu0 %v147, 96
  %v1423 = vpop.permute.xlu0 %1422
  %v1427 = vsel %vm463, %v1006, 0
  %v1430 = vsel %vm463, %v1021, 0
  %v1433 = vsel %vm463, %v1036, 0
  %v1436 = vsel %vm463, %v1051, 0
  %1438 = vmatpush.msra.mxu0 0.0
  %1439 = vmatpush.msra.mxu0 0.0
  %1440 = vmatpush.msra.mxu0 0.0
  %1441 = vmatpush.msra.mxu0 0.0
  %1442 = vmatpush.msra.mxu0 0.0
  %1443 = vmatpush.msra.mxu0 0.0
  %1444 = vmatpush.msra.mxu0 0.0
  %1445 = vmatpush.msra.mxu0 0.0
  %1446 = vmatpush.msra.mxu0 0.0
  %1447 = vmatpush.msra.mxu0 0.0
  %1448 = vmatpush.msra.mxu0 0.0
  %1449 = vmatpush.msra.mxu0 0.0
  %1450 = vmatpush.msra.mxu0 0.0
  %1451 = vmatpush.msra.mxu0 0.0
  %1452 = vmatpush.msra.mxu0 %v1423
  %1453 = vmatpush.msra.mxu0 %v1421
  %1454 = vmatmul.f32.gmra.mxu0 %v1427
  %v1455 = vpop.f32.mrf.mxu0
  %v1456 = vadd.f32 0.0, %v1455
  %1457 = vmatmul.f32.gmra.mxu0 %v1430
  %v1458 = vpop.f32.mrf.mxu0
  %v1459 = vadd.f32 0.0, %v1458
  %1460 = vmatmul.f32.gmra.mxu0 %v1433
  %v1461 = vpop.f32.mrf.mxu0
  %v1462 = vadd.f32 0.0, %v1461
  %1463 = vmatmul.f32.gmra.mxu0 %v1436
  %v1464 = vpop.f32.mrf.mxu0
  %v1465 = vadd.f32 0.0, %v1464
  %1466 = vdwg.mxu0
  %1467 = vrot.lane.b32.xlu0 %v150, 96
  %v1468 = vpop.permute.xlu0 %1467
  %1469 = vrot.lane.b32.xlu0 %v153, 96
  %v1470 = vpop.permute.xlu0 %1469
  %v1474 = vsel %vm463, %v1066, 0
  %v1477 = vsel %vm463, %v1081, 0
  %v1480 = vsel %vm463, %v1096, 0
  %v1483 = vsel %vm463, %v1111, 0
  %1485 = vmatpush.msra.mxu0 0.0
  %1486 = vmatpush.msra.mxu0 0.0
  %1487 = vmatpush.msra.mxu0 0.0
  %1488 = vmatpush.msra.mxu0 0.0
  %1489 = vmatpush.msra.mxu0 0.0
  %1490 = vmatpush.msra.mxu0 0.0
  %1491 = vmatpush.msra.mxu0 0.0
  %1492 = vmatpush.msra.mxu0 0.0
  %1493 = vmatpush.msra.mxu0 0.0
  %1494 = vmatpush.msra.mxu0 0.0
  %1495 = vmatpush.msra.mxu0 0.0
  %1496 = vmatpush.msra.mxu0 0.0
  %1497 = vmatpush.msra.mxu0 0.0
  %1498 = vmatpush.msra.mxu0 0.0
  %1499 = vmatpush.msra.mxu0 %v1470
  %1500 = vmatpush.msra.mxu0 %v1468
  %1501 = vmatmul.f32.gmra.mxu0 %v1474
  %v1502 = vpop.f32.mrf.mxu0
  %v1503 = vadd.f32 0.0, %v1502
  %1504 = vmatmul.f32.gmra.mxu0 %v1477
  %v1505 = vpop.f32.mrf.mxu0
  %v1506 = vadd.f32 0.0, %v1505
  %1507 = vmatmul.f32.gmra.mxu0 %v1480
  %v1508 = vpop.f32.mrf.mxu0
  %v1509 = vadd.f32 0.0, %v1508
  %1510 = vmatmul.f32.gmra.mxu0 %v1483
  %v1511 = vpop.f32.mrf.mxu0
  %v1512 = vadd.f32 0.0, %v1511
  %1513 = vdwg.mxu0
  %1514 = vrot.lane.b32.xlu0 %v156, 96
  %v1515 = vpop.permute.xlu0 %1514
  %1516 = vrot.lane.b32.xlu0 %v159, 96
  %v1517 = vpop.permute.xlu0 %1516
  %v1521 = vsel %vm463, %v1126, 0
  %v1524 = vsel %vm463, %v1141, 0
  %v1527 = vsel %vm463, %v1156, 0
  %v1530 = vsel %vm463, %v1171, 0
  %1532 = vmatpush.msra.mxu0 0.0
  %1533 = vmatpush.msra.mxu0 0.0
  %1534 = vmatpush.msra.mxu0 0.0
  %1535 = vmatpush.msra.mxu0 0.0
  %1536 = vmatpush.msra.mxu0 0.0
  %1537 = vmatpush.msra.mxu0 0.0
  %1538 = vmatpush.msra.mxu0 0.0
  %1539 = vmatpush.msra.mxu0 0.0
  %1540 = vmatpush.msra.mxu0 0.0
  %1541 = vmatpush.msra.mxu0 0.0
  %1542 = vmatpush.msra.mxu0 0.0
  %1543 = vmatpush.msra.mxu0 0.0
  %1544 = vmatpush.msra.mxu0 0.0
  %1545 = vmatpush.msra.mxu0 0.0
  %1546 = vmatpush.msra.mxu0 %v1517
  %1547 = vmatpush.msra.mxu0 %v1515
  %1548 = vmatmul.f32.gmra.mxu0 %v1521
  %v1549 = vpop.f32.mrf.mxu0
  %v1550 = vadd.f32 0.0, %v1549
  %1551 = vmatmul.f32.gmra.mxu0 %v1524
  %v1552 = vpop.f32.mrf.mxu0
  %v1553 = vadd.f32 0.0, %v1552
  %1554 = vmatmul.f32.gmra.mxu0 %v1527
  %v1555 = vpop.f32.mrf.mxu0
  %v1556 = vadd.f32 0.0, %v1555
  %1557 = vmatmul.f32.gmra.mxu0 %v1530
  %v1558 = vpop.f32.mrf.mxu0
  %v1559 = vadd.f32 0.0, %v1558
  %1560 = vdwg.mxu0
  %1561 = vrot.lane.b32.xlu0 %v162, 96
  %v1562 = vpop.permute.xlu0 %1561
  %1563 = vrot.lane.b32.xlu0 %v165, 96
  %v1564 = vpop.permute.xlu0 %1563
  %v1568 = vsel %vm463, %v1186, 0
  %v1571 = vsel %vm463, %v1201, 0
  %v1574 = vsel %vm463, %v1216, 0
  %v1577 = vsel %vm463, %v1231, 0
  %1579 = vmatpush.msra.mxu0 0.0
  %1580 = vmatpush.msra.mxu0 0.0
  %1581 = vmatpush.msra.mxu0 0.0
  %1582 = vmatpush.msra.mxu0 0.0
  %1583 = vmatpush.msra.mxu0 0.0
  %1584 = vmatpush.msra.mxu0 0.0
  %1585 = vmatpush.msra.mxu0 0.0
  %1586 = vmatpush.msra.mxu0 0.0
  %1587 = vmatpush.msra.mxu0 0.0
  %1588 = vmatpush.msra.mxu0 0.0
  %1589 = vmatpush.msra.mxu0 0.0
  %1590 = vmatpush.msra.mxu0 0.0
  %1591 = vmatpush.msra.mxu0 0.0
  %1592 = vmatpush.msra.mxu0 0.0
  %1593 = vmatpush.msra.mxu0 %v1564
  %1594 = vmatpush.msra.mxu0 %v1562
  %1595 = vmatmul.f32.gmra.mxu0 %v1568
  %v1596 = vpop.f32.mrf.mxu0
  %v1597 = vadd.f32 0.0, %v1596
  %1598 = vmatmul.f32.gmra.mxu0 %v1571
  %v1599 = vpop.f32.mrf.mxu0
  %v1600 = vadd.f32 0.0, %v1599
  %1601 = vmatmul.f32.gmra.mxu0 %v1574
  %v1602 = vpop.f32.mrf.mxu0
  %v1603 = vadd.f32 0.0, %v1602
  %1604 = vmatmul.f32.gmra.mxu0 %v1577
  %v1605 = vpop.f32.mrf.mxu0
  %v1606 = vadd.f32 0.0, %v1605
  %1607 = vdwg.mxu0
  %v1608 = vld [vmem:[%s2] sm:$0x1]
  %v1609 = vld [vmem:[%s2 + $0x1] sm:$0x1]
  %v1610 = vld [vmem:[%s2 + $0x2] sm:$0x1]
  %v1611 = vld [vmem:[%s2 + $0x3] sm:$0x1]
  %v1616 = vperm.slane %v1608, 0
  %v1617 = vperm.slane %v1609, 0
  %v1618 = vperm.slane %v1610, 0
  %v1619 = vperm.slane %v1611, 0
  %v1624 = vmul.f32 %v1268, %v1616
  %v1625 = vmul.f32 %v1271, %v1617
  %v1626 = vmul.f32 %v1274, %v1618
  %v1627 = vmul.f32 %v1277, %v1619
  %v1628 = vmul.f32 %v1315, %v1616
  %v1629 = vmul.f32 %v1318, %v1617
  %v1630 = vmul.f32 %v1321, %v1618
  %v1631 = vmul.f32 %v1324, %v1619
  %v1632 = vmul.f32 %v1362, %v1616
  %v1633 = vmul.f32 %v1365, %v1617
  %v1634 = vmul.f32 %v1368, %v1618
  %v1635 = vmul.f32 %v1371, %v1619
  %v1636 = vmul.f32 %v1409, %v1616
  %v1637 = vmul.f32 %v1412, %v1617
  %v1638 = vmul.f32 %v1415, %v1618
  %v1639 = vmul.f32 %v1418, %v1619
  %v1640 = vmul.f32 %v1456, %v1616
  %v1641 = vmul.f32 %v1459, %v1617
  %v1642 = vmul.f32 %v1462, %v1618
  %v1643 = vmul.f32 %v1465, %v1619
  %v1644 = vmul.f32 %v1503, %v1616
  %v1645 = vmul.f32 %v1506, %v1617
  %v1646 = vmul.f32 %v1509, %v1618
  %v1647 = vmul.f32 %v1512, %v1619
  %v1648 = vmul.f32 %v1550, %v1616
  %v1649 = vmul.f32 %v1553, %v1617
  %v1650 = vmul.f32 %v1556, %v1618
  %v1651 = vmul.f32 %v1559, %v1619
  %v1652 = vmul.f32 %v1597, %v1616
  %v1653 = vmul.f32 %v1600, %v1617
  %v1654 = vmul.f32 %v1603, %v1618
  %v1655 = vmul.f32 %v1606, %v1619
  %v1656 = vsel %vm53, %v1624, 0.0
  %v1657 = vsel %vm53, %v1625, 0.0
  %v1658 = vadd.f32 %v1656, %v1657
  %v1659 = vsel %vm53, %v1626, 0.0
  %v1660 = vadd.f32 %v1658, %v1659
  %v1661 = vsel %vm53, %v1627, 0.0
  %v1662 = vadd.f32 %v1660, %v1661
  %v1663 = vsel %vm53, %v1628, 0.0
  %v1664 = vsel %vm53, %v1629, 0.0
  %v1665 = vadd.f32 %v1663, %v1664
  %v1666 = vsel %vm53, %v1630, 0.0
  %v1667 = vadd.f32 %v1665, %v1666
  %v1668 = vsel %vm53, %v1631, 0.0
  %v1669 = vadd.f32 %v1667, %v1668
  %v1670 = vsel %vm53, %v1632, 0.0
  %v1671 = vsel %vm53, %v1633, 0.0
  %v1672 = vadd.f32 %v1670, %v1671
  %v1673 = vsel %vm53, %v1634, 0.0
  %v1674 = vadd.f32 %v1672, %v1673
  %v1675 = vsel %vm53, %v1635, 0.0
  %v1676 = vadd.f32 %v1674, %v1675
  %v1677 = vsel %vm53, %v1636, 0.0
  %v1678 = vsel %vm53, %v1637, 0.0
  %v1679 = vadd.f32 %v1677, %v1678
  %v1680 = vsel %vm53, %v1638, 0.0
  %v1681 = vadd.f32 %v1679, %v1680
  %v1682 = vsel %vm53, %v1639, 0.0
  %v1683 = vadd.f32 %v1681, %v1682
  %v1684 = vsel %vm53, %v1640, 0.0
  %v1685 = vsel %vm53, %v1641, 0.0
  %v1686 = vadd.f32 %v1684, %v1685
  %v1687 = vsel %vm53, %v1642, 0.0
  %v1688 = vadd.f32 %v1686, %v1687
  %v1689 = vsel %vm53, %v1643, 0.0
  %v1690 = vadd.f32 %v1688, %v1689
  %v1691 = vsel %vm53, %v1644, 0.0
  %v1692 = vsel %vm53, %v1645, 0.0
  %v1693 = vadd.f32 %v1691, %v1692
  %v1694 = vsel %vm53, %v1646, 0.0
  %v1695 = vadd.f32 %v1693, %v1694
  %v1696 = vsel %vm53, %v1647, 0.0
  %v1697 = vadd.f32 %v1695, %v1696
  %v1698 = vsel %vm53, %v1648, 0.0
  %v1699 = vsel %vm53, %v1649, 0.0
  %v1700 = vadd.f32 %v1698, %v1699
  %v1701 = vsel %vm53, %v1650, 0.0
  %v1702 = vadd.f32 %v1700, %v1701
  %v1703 = vsel %vm53, %v1651, 0.0
  %v1704 = vadd.f32 %v1702, %v1703
  %v1705 = vsel %vm53, %v1652, 0.0
  %v1706 = vsel %vm53, %v1653, 0.0
  %v1707 = vadd.f32 %v1705, %v1706
  %v1708 = vsel %vm53, %v1654, 0.0
  %v1709 = vadd.f32 %v1707, %v1708
  %v1710 = vsel %vm53, %v1655, 0.0
  %v1711 = vadd.f32 %v1709, %v1710
  %v1712 = vld [vmem:[%s1] sm:$0xff]
  %v1713 = vadd.f32 %v1712, %v1662
  %v1714 = vadd.f32 %v1712, %v1669
  %v1715 = vadd.f32 %v1712, %v1676
  %v1716 = vadd.f32 %v1712, %v1683
  %v1717 = vadd.f32 %v1712, %v1690
  %v1718 = vadd.f32 %v1712, %v1697
  %v1719 = vadd.f32 %v1712, %v1704
  %v1720 = vadd.f32 %v1712, %v1711
  %v1721 = vld [vmem:[%s6] sm:$0xff]
  %v1722 = vld [vmem:[%s6 + $0x8] sm:$0xff]
  %v1723 = vld [vmem:[%s6 + $0x10] sm:$0xff]
  %v1724 = vld [vmem:[%s6 + $0x18] sm:$0xff]
  %v1725 = vld [vmem:[%s7] sm:$0x1]
  %v1727 = vperm.slane %v1725, 0
  %v1730 = vsel %vm53, %v1713, 0
  %v1733 = vsel %vm53, %v1714, 0
  %v1736 = vsel %vm53, %v1715, 0
  %v1739 = vsel %vm53, %v1716, 0
  %v1742 = vsel %vm53, %v1717, 0
  %v1745 = vsel %vm53, %v1718, 0
  %v1748 = vsel %vm53, %v1719, 0
  %v1751 = vsel %vm53, %v1720, 0
  %1753 = vmatpush.msra.mxu0 0.0
  %1754 = vmatpush.msra.mxu0 0.0
  %1755 = vmatpush.msra.mxu0 0.0
  %1756 = vmatpush.msra.mxu0 0.0
  %1757 = vmatpush.msra.mxu0 0.0
  %1758 = vmatpush.msra.mxu0 0.0
  %1759 = vmatpush.msra.mxu0 0.0
  %1760 = vmatpush.msra.mxu0 0.0
  %1761 = vmatpush.msra.mxu0 0.0
  %1762 = vmatpush.msra.mxu0 0.0
  %1763 = vmatpush.msra.mxu0 0.0
  %1764 = vmatpush.msra.mxu0 0.0
  %1765 = vmatpush.msra.mxu0 %v1724
  %1766 = vmatpush.msra.mxu0 %v1723
  %1767 = vmatpush.msra.mxu0 %v1722
  %1768 = vmatpush.msra.mxu0 %v1721
  %1769 = vmatmul.f32.gmra.mxu0 %v1730
  %v1770 = vpop.f32.mrf.mxu0
  %v1771 = vadd.f32 %v1727, %v1770
  %1772 = vmatmul.f32.gmra.mxu0 %v1733
  %v1773 = vpop.f32.mrf.mxu0
  %v1774 = vadd.f32 %v1727, %v1773
  %1775 = vmatmul.f32.gmra.mxu0 %v1736
  %v1776 = vpop.f32.mrf.mxu0
  %v1777 = vadd.f32 %v1727, %v1776
  %1778 = vmatmul.f32.gmra.mxu0 %v1739
  %v1779 = vpop.f32.mrf.mxu0
  %v1780 = vadd.f32 %v1727, %v1779
  %1781 = vmatmul.f32.gmra.mxu0 %v1742
  %v1782 = vpop.f32.mrf.mxu0
  %v1783 = vadd.f32 %v1727, %v1782
  %1784 = vmatmul.f32.gmra.mxu0 %v1745
  %v1785 = vpop.f32.mrf.mxu0
  %v1786 = vadd.f32 %v1727, %v1785
  %1787 = vmatmul.f32.gmra.mxu0 %v1748
  %v1788 = vpop.f32.mrf.mxu0
  %v1789 = vadd.f32 %v1727, %v1788
  %1790 = vmatmul.f32.gmra.mxu0 %v1751
  %v1791 = vpop.f32.mrf.mxu0
  %v1792 = vadd.f32 %v1727, %v1791
  %1793 = vdwg.mxu0
  %v1794 = vmax.f32 %v1771, 0.0
  %v1795 = vmax.f32 %v1774, 0.0
  %v1796 = vmax.f32 %v1777, 0.0
  %v1797 = vmax.f32 %v1780, 0.0
  %v1798 = vmax.f32 %v1783, 0.0
  %v1799 = vmax.f32 %v1786, 0.0
  %v1800 = vmax.f32 %v1789, 0.0
  %v1801 = vmax.f32 %v1792, 0.0
  %v1802 = vadd.f32 %v1713, %v1794
  %v1803 = vadd.f32 %v1714, %v1795
  %v1804 = vadd.f32 %v1715, %v1796
  %v1805 = vadd.f32 %v1716, %v1797
  %v1806 = vadd.f32 %v1717, %v1798
  %v1807 = vadd.f32 %v1718, %v1799
  %v1808 = vadd.f32 %v1719, %v1800
  %v1809 = vadd.f32 %v1720, %v1801
  %1810 = vst.msk [vmem:[%s8] sm:$0xff] %vm53, %v1802
  %1811 = vst.msk [vmem:[%s8 + $0x8] sm:$0xff] %vm53, %v1803
  %1812 = vst.msk [vmem:[%s8 + $0x10] sm:$0xff] %vm53, %v1804
  %1813 = vst.msk [vmem:[%s8 + $0x18] sm:$0xff] %vm53, %v1805
  %1814 = vst.msk [vmem:[%s8 + $0x20] sm:$0xff] %vm53, %v1806
  %1815 = vst.msk [vmem:[%s8 + $0x28] sm:$0xff] %vm53, %v1807
  %1816 = vst.msk [vmem:[%s8 + $0x30] sm:$0xff] %vm53, %v1808
  %1817 = vst.msk [vmem:[%s8 + $0x38] sm:$0xff] %vm53, %v1809
  // Predicated region
  $region34: #{tpu_custom_call.1} parent=0 // pred_check
    _
  $region35: #{tpu_custom_call.1} parent=0 // pred_check_branch
    %1819 = sbr.rel (0) target = $region37
  $region36: #{tpu_custom_call.1} parent=0 // pred_region
    _
  $region37: #{tpu_custom_call.1} parent=0 // pred_fallthru
    _
  // Predicated region
  $region38: #{tpu_custom_call.1} parent=0 // pred_check
    _
  $region39: #{tpu_custom_call.1} parent=0 // pred_check_branch
    %1821 = sbr.rel (0) target = $region41
  $region40: #{tpu_custom_call.1} parent=0 // pred_region
    _
  $region41: #{tpu_custom_call.1} parent=0 // pred_fallthru
    _

</llo_original>
